<compile_context>
chip_gen: v5e
topology: v5e:2x2
jax: 0.10.0
libtpu: 0.0.40
codegen_flags: <defaults>
</compile_context>

<pallas_src>
import functools

import jax
import jax.numpy as jnp
from jax.experimental import pallas as pl
from jax.experimental.pallas import tpu as pltpu

NEG_SLOPE = 0.01                      # nn.LeakyReLU default
_VMEM_LIMIT = 32 * 1024 * 1024        # leaves headroom even on v7x (64 MiB physical)


def _round_up(x, m):
    return (x + m - 1) // m * m


def _pad2d(a, rows, cols):
    r, c = a.shape
    if r == rows and c == cols:
        return a
    return jnp.pad(a, ((0, rows - r), (0, cols - c)))


def _pick_tile(total, cap, unit):
    """Largest multiple of `unit` <= cap that divides `total` (total % unit == 0)."""
    t = max(unit, (min(cap, total) // unit) * unit)
    while total % t:
        t -= unit
    return t


def _stable_sigmoid(y):
    z = jnp.exp(-jnp.abs(y))                       # argument <= 0: never overflows
    return jnp.where(y >= 0, 1.0 / (1.0 + z), z / (1.0 + z))


# ----------------------------------------------------------------------------
# Tiled fused matmul + bias + activation kernel (bf16 MXU, f32 accumulate)
# ----------------------------------------------------------------------------
def _linear_kernel(x_ref, w_ref, b_ref, o_ref, acc_ref, *, act):
    @pl.when(pl.program_id(2) == 0)
    def _init():
        acc_ref[...] = jnp.zeros_like(acc_ref)

    acc_ref[...] += jnp.dot(x_ref[...], w_ref[...],
                            preferred_element_type=jnp.float32)

    @pl.when(pl.program_id(2) == pl.num_programs(2) - 1)
    def _finalize():
        y = acc_ref[...] + b_ref[...]              # bias added once, at finalize
        if act == "leaky_relu":
            y = jnp.where(y >= 0, y, NEG_SLOPE * y)
        o_ref[...] = y.astype(o_ref.dtype)


def pallas_linear(x, wp, bp, act="none", out_dtype=jnp.bfloat16, n_out=None,
                  tm=256, tn=256, tk=1024):
    """y = act(x @ w + b).  wp:(Kp,Np) bf16 pre-padded, bp:(1,Np) f32 pre-padded."""
    M, K = x.shape
    Kp, Np = wp.shape
    assert K <= Kp
    tm = min(tm, _round_up(M, 8))
    Mp = _round_up(M, tm)
    tn = _pick_tile(Np, tn, 128)
    tk = _pick_tile(Kp, tk, 128)

    xp = _pad2d(x.astype(jnp.bfloat16), Mp, Kp)

    grid = (Mp // tm, Np // tn, Kp // tk)
    out = pl.pallas_call(
        functools.partial(_linear_kernel, act=act),
        out_shape=jax.ShapeDtypeStruct((Mp, Np), out_dtype),
        grid_spec=pltpu.PrefetchScalarGridSpec(
            num_scalar_prefetch=0,
            grid=grid,
            in_specs=[
                pl.BlockSpec((tm, tk), lambda i, j, k: (i, k)),
                pl.BlockSpec((tk, tn), lambda i, j, k: (k, j)),
                pl.BlockSpec((1, tn), lambda i, j, k: (0, j)),
            ],
            out_specs=pl.BlockSpec((tm, tn), lambda i, j, k: (i, j)),
            scratch_shapes=[pltpu.VMEM((tm, tn), jnp.float32)],
        ),
        compiler_params=pltpu.CompilerParams(
            dimension_semantics=("parallel", "parallel", "arbitrary"),
            vmem_limit_bytes=_VMEM_LIMIT,
        ),
    )(xp, wp, bp)
    out = out[:M]
    if n_out is not None:
        out = out[:, :n_out]
    return out


# ----------------------------------------------------------------------------
# Fused hidden-MLP stack + head1 + head2 + sigmoid, one pallas_call.
# Activation tile stays resident in VMEM across the layer axis; each (Hs,Hs) bf16
# weight block is streamed.  The stacked last "layer" is head1 (zero-padded to Hs
# columns); head2 is a multiply + lane reduction on the resident head1 output.
# ----------------------------------------------------------------------------
def _mlp_head_kernel(x_ref, w_ref, b_ref, w2_ref, b2_ref, o_ref, act_ref):
    l = pl.program_id(1)
    last = pl.num_programs(1) - 1

    @pl.when(l == 0)
    def _load_input():
        act_ref[...] = x_ref[...]

    h = jnp.dot(act_ref[...], w_ref[...], preferred_element_type=jnp.float32)
    h = h + b_ref[...]
    h = jnp.where(h >= 0, h, NEG_SLOPE * h)        # LeakyReLU (hidden layers & head1)

    @pl.when(l < last)
    def _carry():
        act_ref[...] = h.astype(act_ref.dtype)

    @pl.when(l == last)
    def _head2():
        y = jnp.sum(h * w2_ref[...], axis=-1, keepdims=True) + b2_ref[...]
        s = _stable_sigmoid(y)
        # lane-dense store: broadcast the single output column across 128 lanes.
        o_ref[...] = jnp.broadcast_to(s, o_ref.shape).astype(o_ref.dtype)


def pallas_mlp_head(x, w_stack, b_stack, w2p, b2p, tm=256):
    """sigmoid(head2(leaky(head1(leaky(...leaky(x@W_l+b_l)...))))) -> (M, 1)."""
    M, _ = x.shape
    L, Hs, _ = w_stack.shape
    tm = min(tm, _round_up(M, 8))
    Mp = _round_up(M, tm)
    xp = _pad2d(x.astype(jnp.bfloat16), Mp, Hs)

    out = pl.pallas_call(
        _mlp_head_kernel,
        out_shape=jax.ShapeDtypeStruct((Mp, 128), jnp.float32),
        grid_spec=pltpu.PrefetchScalarGridSpec(
            num_scalar_prefetch=0,
            grid=(Mp // tm, L),
            in_specs=[
                pl.BlockSpec((tm, Hs), lambda i, l: (i, 0)),
                pl.BlockSpec((None, Hs, Hs), lambda i, l: (l, 0, 0)),
                pl.BlockSpec((None, 1, Hs), lambda i, l: (l, 0, 0)),
                pl.BlockSpec((1, Hs), lambda i, l: (0, 0)),
                pl.BlockSpec((1, 1), lambda i, l: (0, 0)),
            ],
            out_specs=pl.BlockSpec((tm, 128), lambda i, l: (i, 0)),
            scratch_shapes=[pltpu.VMEM((tm, Hs), jnp.bfloat16)],
        ),
        compiler_params=pltpu.CompilerParams(
            dimension_semantics=("parallel", "arbitrary"),
            vmem_limit_bytes=_VMEM_LIMIT,
        ),
    )(xp, w_stack, b_stack, w2p, b2p)
    return out[:M, :1]


# ----------------------------------------------------------------------------
# Channels-last im2col for 3D conv (bf16 patches; matmul runs in the Pallas kernel)
# ----------------------------------------------------------------------------
def im2col_3d_ndhwc(x, k=3, stride=2, pad=1):
    """x: (N, D, H, W, C) -> patches (N*Do*Ho*Wo, k^3*C), feature order (kd,kh,kw,C)."""
    N, D, H, W, C = x.shape
    xp = jnp.pad(x, ((0, 0), (pad, pad), (pad, pad), (pad, pad), (0, 0)))
    Do = (D + 2 * pad - k) // stride + 1
    Ho = (H + 2 * pad - k) // stride + 1
    Wo = (W + 2 * pad - k) // stride + 1
    cols = []
    for kd in range(k):
        for kh in range(k):
            for kw in range(k):
                cols.append(xp[:,
                               kd:kd + Do * stride:stride,
                               kh:kh + Ho * stride:stride,
                               kw:kw + Wo * stride:stride, :])
    patches = jnp.concatenate(cols, axis=-1)          # (N, Do, Ho, Wo, k^3*C) bf16
    return patches.reshape(N * Do * Ho * Wo, k * k * k * C), (Do, Ho, Wo)


def voxnet_encoder_global(conv_params, conv_channels, occ_grid):
    """occ_grid: (bs, C, D, H, W) -> (bs, feat) bf16.  Channels-last throughout."""
    x = jnp.transpose(occ_grid, (0, 2, 3, 4, 1)).astype(jnp.bfloat16)   # NDHWC, bf16
    for (wp, bp), cout in zip(conv_params, conv_channels):
        n = x.shape[0]
        patches, (Do, Ho, Wo) = im2col_3d_ndhwc(x)
        y = pallas_linear(patches, wp, bp, act="leaky_relu",
                          out_dtype=jnp.bfloat16, n_out=cout)
        x = y.reshape(n, Do, Ho, Wo, cout)                               # channels-last
    return x.reshape(x.shape[0], -1)


# ----------------------------------------------------------------------------
# BatchNorm1d (eval) folding — precomputed once at parameter-build time
# ----------------------------------------------------------------------------
def fold_bn(w, b, gamma, beta, mean, var, eps=1e-5):
    scale = gamma / jnp.sqrt(var + eps)
    return w * scale[None, :], (b - mean) * scale + beta


# ----------------------------------------------------------------------------
# Parameter construction (deterministic, synthetic), pre-cast + pre-padded.
# ----------------------------------------------------------------------------
def build_model_params(key, state_dim, goal_dim, h_dim, linear_depth, occ_shape,
                       conv_channels=(8, 16)):
    keys = iter(jax.random.split(key, 64))

    def nk():
        return next(keys)

    def lin(kin, kout):
        w = 0.1 * jax.random.normal(nk(), (kin, kout), jnp.float32)   # stored (in, out)
        b = 0.05 * jax.random.normal(nk(), (kout,), jnp.float32)
        return w, b

    def bn(n):
        gamma = 1.0 + 0.1 * jax.random.normal(nk(), (n,), jnp.float32)
        beta = 0.1 * jax.random.normal(nk(), (n,), jnp.float32)
        mean = 0.1 * jax.random.normal(nk(), (n,), jnp.float32)
        var = 1.0 + 0.1 * jnp.abs(jax.random.normal(nk(), (n,), jnp.float32))
        return gamma, beta, mean, var

    in_ch = occ_shape[1]
    D = occ_shape[-3]

    # Conv weights: flatten to im2col layout (kd,kh,kw,Cin)xCout, pad + bf16, once.
    convs = []
    cin = in_ch
    for cout in conv_channels:
        w = 0.1 * jax.random.normal(nk(), (cout, cin, 3, 3, 3), jnp.float32)
        b = 0.05 * jax.random.normal(nk(), (cout,), jnp.float32)
        wf = jnp.transpose(w, (2, 3, 4, 1, 0)).reshape(27 * cin, cout)
        Kp, Np = _round_up(27 * cin, 128), _round_up(cout, 128)
        convs.append((_pad2d(wf, Kp, Np).astype(jnp.bfloat16),
                      _pad2d(b.reshape(1, -1), 1, Np).astype(jnp.float32)))
        cin = cout

    # TODO(synk): assumes cubic grid with D divisible by 2**len(conv_channels).
    feat_spatial = D // (2 ** len(conv_channels))
    occ_feat = conv_channels[-1] * feat_spatial ** 3

    # First MLP layer (BN folded), split into env part ([f,start,goal]) and sample
    # part (samples) so fixed_env never repeats the large encoder feature.
    in_dim = state_dim * 2 + goal_dim + occ_feat
    w0, b0 = fold_bn(*lin(in_dim, h_dim), *bn(h_dim))
    split = occ_feat + state_dim + goal_dim
    Hp0 = _round_up(h_dim, 128)
    Kp_env, Kp_smp = _round_up(split, 128), _round_up(state_dim, 128)
    mlp0_env = (_pad2d(w0[:split], Kp_env, Hp0).astype(jnp.bfloat16),
                _pad2d(b0.reshape(1, -1), 1, Hp0).astype(jnp.float32))
    mlp0_smp = (_pad2d(w0[split:], Kp_smp, Hp0).astype(jnp.bfloat16),
                jnp.zeros((1, Hp0), jnp.float32))

    # Hidden layers (BN folded) + head1 stacked into one (L, Hs, Hs) bf16 tensor.
    Hs = _round_up(max(h_dim, 256), 128)
    ws, bs_ = [], []
    for _ in range(linear_depth):
        w, b = fold_bn(*lin(h_dim, h_dim), *bn(h_dim))
        ws.append(_pad2d(w, Hs, Hs))
        bs_.append(_pad2d(b.reshape(1, -1), 1, Hs))
    w1, b1 = lin(h_dim, 256)                        # head1 (no BN)
    ws.append(_pad2d(w1, Hs, Hs))
    bs_.append(_pad2d(b1.reshape(1, -1), 1, Hs))
    stack_w = jnp.stack(ws).astype(jnp.bfloat16)    # (L, Hs, Hs)
    stack_b = jnp.stack(bs_).astype(jnp.float32)    # (L, 1, Hs)

    w2, b2 = lin(256, 1)                            # head2
    head2_w = _pad2d(w2.T, 1, Hs).astype(jnp.float32)      # (1, Hs), zero-padded
    head2_b = b2.reshape(1, 1).astype(jnp.float32)

    params = {
        "convs": convs,
        "mlp0_env": mlp0_env,
        "mlp0_smp": mlp0_smp,
        "stack_w": stack_w,
        "stack_b": stack_b,
        "head2_w": head2_w,
        "head2_b": head2_b,
    }
    return params, occ_feat


# ----------------------------------------------------------------------------
# SelectorGlobal forward
# ----------------------------------------------------------------------------
def selector_global_forward(params, occ_grid, start, goal, samples,
                            fixed_env=False, conv_channels=(8, 16)):
    bs = occ_grid.shape[0]
    f = voxnet_encoder_global(params["convs"], conv_channels, occ_grid)   # (bs, occ_feat) bf16

    env_in = jnp.concatenate(
        [f, start.astype(jnp.bfloat16), goal.astype(jnp.bfloat16)], axis=-1)
    w_env, b_env = params["mlp0_env"]
    w_smp, b_smp = params["mlp0_smp"]
    env_part = pallas_linear(env_in, w_env, b_env, act="none",
                             out_dtype=jnp.float32)                       # (bs, Hp0)

    if fixed_env:
        num_of_sample = samples.shape[1]
        smp = samples.reshape(bs * num_of_sample, samples.shape[2]).astype(jnp.bfloat16)
        smp_part = pallas_linear(smp, w_smp, b_smp, act="none",
                                 out_dtype=jnp.float32)                   # (bs*ns, Hp0)
        h = env_part[:, None, :] + smp_part.reshape(bs, num_of_sample, -1)
    else:
        num_of_sample = 1
        smp_part = pallas_linear(samples.astype(jnp.bfloat16), w_smp, b_smp,
                                 act="none", out_dtype=jnp.float32)       # (bs, Hp0)
        h = (env_part + smp_part)[:, None, :]

    h = jnp.where(h >= 0, h, NEG_SLOPE * h)                               # LeakyReLU
    x = h.reshape(bs * num_of_sample, -1).astype(jnp.bfloat16)

    # Fused hidden MLP stack + head1 + head2 + sigmoid (single pallas_call).
    y = pallas_mlp_head(x, params["stack_w"], params["stack_b"],
                        params["head2_w"], params["head2_b"])
    return y.reshape(bs, num_of_sample)


# ----------------------------------------------------------------------------
if __name__ == "__main__":
    state_dim = 11
    goal_dim = 11
    h_dim = 128          # small stand-in for default 1024
    linear_depth = 2
    bs = 2
    ns = 4
    occ_shape = (bs, 4, 8, 8, 8)   # bs x 4 x occ_dims (3D grid)
    conv_channels = (8, 16)

    key = jax.random.PRNGKey(0)
    k_params, k_occ, k_start, k_goal, k_samp, k_samp2 = jax.random.split(key, 6)

    params, occ_feat_size = build_model_params(
        k_params, state_dim, goal_dim, h_dim, linear_depth, occ_shape, conv_channels)

    occ_grid = (jax.random.uniform(k_occ, occ_shape) > 0.5).astype(jnp.float32)
    start = jax.random.normal(k_start, (bs, state_dim), jnp.float32)
    goal = jax.random.normal(k_goal, (bs, goal_dim), jnp.float32)
    samples = jax.random.normal(k_samp, (bs, state_dim), jnp.float32)
    samples_multi = jax.random.normal(k_samp2, (bs, ns, state_dim), jnp.float32)

    fwd = jax.jit(selector_global_forward,
                  static_argnames=("fixed_env", "conv_channels"))

    y = jax.block_until_ready(
        fwd(params, occ_grid, start, goal, samples, fixed_env=False,
            conv_channels=conv_channels))
    assert y.shape == (bs, 1)
    assert bool(jnp.all(jnp.isfinite(y))) and bool(jnp.all((y >= 0) & (y <= 1)))

    y2 = jax.block_until_ready(
        fwd(params, occ_grid, start, goal, samples_multi, fixed_env=True,
            conv_channels=conv_channels))
    assert y2.shape == (bs, ns)
    assert bool(jnp.all(jnp.isfinite(y2))) and bool(jnp.all((y2 >= 0) & (y2 <= 1)))

    print("KERNEL_OK")
</pallas_src>

<mosaic_0001>
module attributes {stable_mosaic.version = 11 : i64} {
  func.func @_linear_kernel(%arg0: i32, %arg1: i32, %arg2: i32, %arg3: memref<128x128xbf16, #tpu.memory_space<vmem>>, %arg4: memref<128x128xbf16, #tpu.memory_space<vmem>>, %arg5: memref<1x128xf32, #tpu.memory_space<vmem>>, %arg6: memref<128x128xbf16, #tpu.memory_space<vmem>>, %arg7: memref<128x128xf32, #tpu.memory_space<vmem>>) attributes {dimension_semantics = [#tpu.dimension_semantics<parallel>, #tpu.dimension_semantics<parallel>, #tpu.dimension_semantics<arbitrary>], iteration_bounds = array<i64: 1, 1, 1>, scalar_prefetch = 0 : i64, scratch_operands = 1 : i64, tpu.core_type = #tpu.core_type<tc>, window_params = [{transform_indices = @transform_0, window_bounds = array<i64: 128, 128>}, {transform_indices = @transform_1, window_bounds = array<i64: 128, 128>}, {transform_indices = @transform_2, window_bounds = array<i64: 1, 128>}, {transform_indices = @transform_3, window_bounds = array<i64: 128, 128>}]} {
    %c0_i32 = arith.constant 0 : i32
    %0 = arith.cmpi eq, %arg2, %c0_i32 : i32
    %1 = arith.extui %0 : i1 to i32
    %c0_i32_0 = arith.constant 0 : i32
    %2 = arith.cmpi ne, %1, %c0_i32_0 : i32
    scf.if %2 {
      %cst_10 = arith.constant 0.000000e+00 : f32
      %12 = vector.broadcast %cst_10 : f32 to vector<128x128xf32>
      %c0_11 = arith.constant 0 : index
      %c0_12 = arith.constant 0 : index
      %13 = vector.load %arg7[%c0_11, %c0_12] : memref<128x128xf32, #tpu.memory_space<vmem>>, vector<128x128xf32>
      tpu.vector_store %arg7[%c0_11, %c0_12], %12 {strides = array<i32>} : memref<128x128xf32, #tpu.memory_space<vmem>>, vector<128x128xf32>,
    } else {
    }
    %c0 = arith.constant 0 : index
    %c0_1 = arith.constant 0 : index
    %3 = vector.load %arg7[%c0, %c0_1] : memref<128x128xf32, #tpu.memory_space<vmem>>, vector<128x128xf32>
    %c0_2 = arith.constant 0 : index
    %c0_3 = arith.constant 0 : index
    %4 = vector.load %arg3[%c0_2, %c0_3] : memref<128x128xbf16, #tpu.memory_space<vmem>>, vector<128x128xbf16>
    %c0_4 = arith.constant 0 : index
    %c0_5 = arith.constant 0 : index
    %5 = vector.load %arg4[%c0_4, %c0_5] : memref<128x128xbf16, #tpu.memory_space<vmem>>, vector<128x128xbf16>
    %cst = arith.constant dense<0.000000e+00> : vector<128x128xf32>
    %6 = tpu.matmul %4, %5, %cst {dimension_numbers = #tpu.dot_dimension_numbers<[1], [0], [0], [1], [0, 0, 1, 1], [], []>} : vector<128x128xbf16>, vector<128x128xbf16>, vector<128x128xf32> -> vector<128x128xf32>
    %7 = arith.addf %3, %6 : vector<128x128xf32>
    %c0_6 = arith.constant 0 : index
    %c0_7 = arith.constant 0 : index
    %8 = vector.load %arg7[%c0_6, %c0_7] : memref<128x128xf32, #tpu.memory_space<vmem>>, vector<128x128xf32>
    tpu.vector_store %arg7[%c0_6, %c0_7], %7 {strides = array<i32>} : memref<128x128xf32, #tpu.memory_space<vmem>>, vector<128x128xf32>,
    %c0_i32_8 = arith.constant 0 : i32
    %9 = arith.cmpi eq, %arg2, %c0_i32_8 : i32
    %10 = arith.extui %9 : i1 to i32
    %c0_i32_9 = arith.constant 0 : i32
    %11 = arith.cmpi ne, %10, %c0_i32_9 : i32
    scf.if %11 {
      %c0_10 = arith.constant 0 : index
      %c0_11 = arith.constant 0 : index
      %12 = vector.load %arg7[%c0_10, %c0_11] : memref<128x128xf32, #tpu.memory_space<vmem>>, vector<128x128xf32>
      %c0_12 = arith.constant 0 : index
      %c0_13 = arith.constant 0 : index
      %13 = vector.load %arg5[%c0_12, %c0_13] : memref<1x128xf32, #tpu.memory_space<vmem>>, vector<1x128xf32>
      %14 = vector.broadcast %13 : vector<1x128xf32> to vector<128x128xf32>
      %15 = arith.addf %12, %14 : vector<128x128xf32>
      %cst_14 = arith.constant 0.000000e+00 : f32
      %16 = vector.broadcast %cst_14 : f32 to vector<128x128xf32>
      %17 = arith.cmpf oge, %15, %16 : vector<128x128xf32>
      %cst_15 = arith.constant 0.00999999977 : f32
      %18 = vector.broadcast %cst_15 : f32 to vector<128x128xf32>
      %19 = arith.mulf %18, %15 : vector<128x128xf32>
      %20 = arith.select %17, %15, %19 : vector<128x128xi1>, vector<128x128xf32>
      %21 = arith.truncf %20 : vector<128x128xf32> to vector<128x128xbf16>
      %c0_16 = arith.constant 0 : index
      %c0_17 = arith.constant 0 : index
      %22 = vector.load %arg6[%c0_16, %c0_17] : memref<128x128xbf16, #tpu.memory_space<vmem>>, vector<128x128xbf16>
      tpu.vector_store %arg6[%c0_16, %c0_17], %21 {strides = array<i32>} : memref<128x128xbf16, #tpu.memory_space<vmem>>, vector<128x128xbf16>,
    } else {
    }
    return
  }
  func.func @transform_0(%arg0: i32, %arg1: i32, %arg2: i32) -> (i32, i32) {
    %c0_i32 = arith.constant 0 : i32
    return %arg0, %arg2 : i32, i32
  }
  func.func @transform_1(%arg0: i32, %arg1: i32, %arg2: i32) -> (i32, i32) {
    %c0_i32 = arith.constant 0 : i32
    return %arg2, %arg1 : i32, i32
  }
  func.func @transform_2(%arg0: i32, %arg1: i32, %arg2: i32) -> (i32, i32) {
    %c0_i32 = arith.constant 0 : i32
    %c0_i32_0 = arith.constant 0 : i32
    return %c0_i32, %arg1 : i32, i32
  }
  func.func @transform_3(%arg0: i32, %arg1: i32, %arg2: i32) -> (i32, i32) {
    %c0_i32 = arith.constant 0 : i32
    return %arg0, %arg1 : i32, i32
  }
}

module attributes {stable_mosaic.version = 11 : i64} {
  func.func @_linear_kernel(%arg0: i32, %arg1: i32, %arg2: i32, %arg3: memref<16x256xbf16, #tpu.memory_space<vmem>>, %arg4: memref<256x128xbf16, #tpu.memory_space<vmem>>, %arg5: memref<1x128xf32, #tpu.memory_space<vmem>>, %arg6: memref<16x128xbf16, #tpu.memory_space<vmem>>, %arg7: memref<16x128xf32, #tpu.memory_space<vmem>>) attributes {dimension_semantics = [#tpu.dimension_semantics<parallel>, #tpu.dimension_semantics<parallel>, #tpu.dimension_semantics<arbitrary>], iteration_bounds = array<i64: 1, 1, 1>, scalar_prefetch = 0 : i64, scratch_operands = 1 : i64, tpu.core_type = #tpu.core_type<tc>, window_params = [{transform_indices = @transform_0, window_bounds = array<i64: 16, 256>}, {transform_indices = @transform_1, window_bounds = array<i64: 256, 128>}, {transform_indices = @transform_2, window_bounds = array<i64: 1, 128>}, {transform_indices = @transform_3, window_bounds = array<i64: 16, 128>}]} {
    %c0_i32 = arith.constant 0 : i32
    %0 = arith.cmpi eq, %arg2, %c0_i32 : i32
    %1 = arith.extui %0 : i1 to i32
    %c0_i32_0 = arith.constant 0 : i32
    %2 = arith.cmpi ne, %1, %c0_i32_0 : i32
    scf.if %2 {
      %cst_10 = arith.constant 0.000000e+00 : f32
      %12 = vector.broadcast %cst_10 : f32 to vector<16x128xf32>
      %c0_11 = arith.constant 0 : index
      %c0_12 = arith.constant 0 : index
      %13 = vector.load %arg7[%c0_11, %c0_12] : memref<16x128xf32, #tpu.memory_space<vmem>>, vector<16x128xf32>
      tpu.vector_store %arg7[%c0_11, %c0_12], %12 {strides = array<i32>} : memref<16x128xf32, #tpu.memory_space<vmem>>, vector<16x128xf32>,
    } else {
    }
    %c0 = arith.constant 0 : index
    %c0_1 = arith.constant 0 : index
    %3 = vector.load %arg7[%c0, %c0_1] : memref<16x128xf32, #tpu.memory_space<vmem>>, vector<16x128xf32>
    %c0_2 = arith.constant 0 : index
    %c0_3 = arith.constant 0 : index
    %4 = vector.load %arg3[%c0_2, %c0_3] : memref<16x256xbf16, #tpu.memory_space<vmem>>, vector<16x256xbf16>
    %c0_4 = arith.constant 0 : index
    %c0_5 = arith.constant 0 : index
    %5 = vector.load %arg4[%c0_4, %c0_5] : memref<256x128xbf16, #tpu.memory_space<vmem>>, vector<256x128xbf16>
    %cst = arith.constant dense<0.000000e+00> : vector<16x128xf32>
    %6 = tpu.matmul %4, %5, %cst {dimension_numbers = #tpu.dot_dimension_numbers<[1], [0], [0], [1], [0, 0, 1, 1], [], []>} : vector<16x256xbf16>, vector<256x128xbf16>, vector<16x128xf32> -> vector<16x128xf32>
    %7 = arith.addf %3, %6 : vector<16x128xf32>
    %c0_6 = arith.constant 0 : index
    %c0_7 = arith.constant 0 : index
    %8 = vector.load %arg7[%c0_6, %c0_7] : memref<16x128xf32, #tpu.memory_space<vmem>>, vector<16x128xf32>
    tpu.vector_store %arg7[%c0_6, %c0_7], %7 {strides = array<i32>} : memref<16x128xf32, #tpu.memory_space<vmem>>, vector<16x128xf32>,
    %c0_i32_8 = arith.constant 0 : i32
    %9 = arith.cmpi eq, %arg2, %c0_i32_8 : i32
    %10 = arith.extui %9 : i1 to i32
    %c0_i32_9 = arith.constant 0 : i32
    %11 = arith.cmpi ne, %10, %c0_i32_9 : i32
    scf.if %11 {
      %c0_10 = arith.constant 0 : index
      %c0_11 = arith.constant 0 : index
      %12 = vector.load %arg7[%c0_10, %c0_11] : memref<16x128xf32, #tpu.memory_space<vmem>>, vector<16x128xf32>
      %c0_12 = arith.constant 0 : index
      %c0_13 = arith.constant 0 : index
      %13 = vector.load %arg5[%c0_12, %c0_13] : memref<1x128xf32, #tpu.memory_space<vmem>>, vector<1x128xf32>
      %14 = vector.broadcast %13 : vector<1x128xf32> to vector<16x128xf32>
      %15 = arith.addf %12, %14 : vector<16x128xf32>
      %cst_14 = arith.constant 0.000000e+00 : f32
      %16 = vector.broadcast %cst_14 : f32 to vector<16x128xf32>
      %17 = arith.cmpf oge, %15, %16 : vector<16x128xf32>
      %cst_15 = arith.constant 0.00999999977 : f32
      %18 = vector.broadcast %cst_15 : f32 to vector<16x128xf32>
      %19 = arith.mulf %18, %15 : vector<16x128xf32>
      %20 = arith.select %17, %15, %19 : vector<16x128xi1>, vector<16x128xf32>
      %21 = arith.truncf %20 : vector<16x128xf32> to vector<16x128xbf16>
      %c0_16 = arith.constant 0 : index
      %c0_17 = arith.constant 0 : index
      %22 = vector.load %arg6[%c0_16, %c0_17] : memref<16x128xbf16, #tpu.memory_space<vmem>>, vector<16x128xbf16>
      tpu.vector_store %arg6[%c0_16, %c0_17], %21 {strides = array<i32>} : memref<16x128xbf16, #tpu.memory_space<vmem>>, vector<16x128xbf16>,
    } else {
    }
    return
  }
  func.func @transform_0(%arg0: i32, %arg1: i32, %arg2: i32) -> (i32, i32) {
    %c0_i32 = arith.constant 0 : i32
    return %arg0, %arg2 : i32, i32
  }
  func.func @transform_1(%arg0: i32, %arg1: i32, %arg2: i32) -> (i32, i32) {
    %c0_i32 = arith.constant 0 : i32
    return %arg2, %arg1 : i32, i32
  }
  func.func @transform_2(%arg0: i32, %arg1: i32, %arg2: i32) -> (i32, i32) {
    %c0_i32 = arith.constant 0 : i32
    %c0_i32_0 = arith.constant 0 : i32
    return %c0_i32, %arg1 : i32, i32
  }
  func.func @transform_3(%arg0: i32, %arg1: i32, %arg2: i32) -> (i32, i32) {
    %c0_i32 = arith.constant 0 : i32
    return %arg0, %arg1 : i32, i32
  }
}

module attributes {stable_mosaic.version = 11 : i64} {
  func.func @_linear_kernel(%arg0: i32, %arg1: i32, %arg2: i32, %arg3: memref<8x256xbf16, #tpu.memory_space<vmem>>, %arg4: memref<256x128xbf16, #tpu.memory_space<vmem>>, %arg5: memref<1x128xf32, #tpu.memory_space<vmem>>, %arg6: memref<8x128xf32, #tpu.memory_space<vmem>>, %arg7: memref<8x128xf32, #tpu.memory_space<vmem>>) attributes {dimension_semantics = [#tpu.dimension_semantics<parallel>, #tpu.dimension_semantics<parallel>, #tpu.dimension_semantics<arbitrary>], iteration_bounds = array<i64: 1, 1, 1>, scalar_prefetch = 0 : i64, scratch_operands = 1 : i64, tpu.core_type = #tpu.core_type<tc>, window_params = [{transform_indices = @transform_0, window_bounds = array<i64: 8, 256>}, {transform_indices = @transform_1, window_bounds = array<i64: 256, 128>}, {transform_indices = @transform_2, window_bounds = array<i64: 1, 128>}, {transform_indices = @transform_3, window_bounds = array<i64: 8, 128>}]} {
    %c0_i32 = arith.constant 0 : i32
    %0 = arith.cmpi eq, %arg2, %c0_i32 : i32
    %1 = arith.extui %0 : i1 to i32
    %c0_i32_0 = arith.constant 0 : i32
    %2 = arith.cmpi ne, %1, %c0_i32_0 : i32
    scf.if %2 {
      %cst_10 = arith.constant 0.000000e+00 : f32
      %12 = vector.broadcast %cst_10 : f32 to vector<8x128xf32>
      %c0_11 = arith.constant 0 : index
      %c0_12 = arith.constant 0 : index
      %13 = vector.load %arg7[%c0_11, %c0_12] : memref<8x128xf32, #tpu.memory_space<vmem>>, vector<8x128xf32>
      tpu.vector_store %arg7[%c0_11, %c0_12], %12 {strides = array<i32>} : memref<8x128xf32, #tpu.memory_space<vmem>>, vector<8x128xf32>,
    } else {
    }
    %c0 = arith.constant 0 : index
    %c0_1 = arith.constant 0 : index
    %3 = vector.load %arg7[%c0, %c0_1] : memref<8x128xf32, #tpu.memory_space<vmem>>, vector<8x128xf32>
    %c0_2 = arith.constant 0 : index
    %c0_3 = arith.constant 0 : index
    %4 = vector.load %arg3[%c0_2, %c0_3] : memref<8x256xbf16, #tpu.memory_space<vmem>>, vector<8x256xbf16>
    %c0_4 = arith.constant 0 : index
    %c0_5 = arith.constant 0 : index
    %5 = vector.load %arg4[%c0_4, %c0_5] : memref<256x128xbf16, #tpu.memory_space<vmem>>, vector<256x128xbf16>
    %cst = arith.constant dense<0.000000e+00> : vector<8x128xf32>
    %6 = tpu.matmul %4, %5, %cst {dimension_numbers = #tpu.dot_dimension_numbers<[1], [0], [0], [1], [0, 0, 1, 1], [], []>} : vector<8x256xbf16>, vector<256x128xbf16>, vector<8x128xf32> -> vector<8x128xf32>
    %7 = arith.addf %3, %6 : vector<8x128xf32>
    %c0_6 = arith.constant 0 : index
    %c0_7 = arith.constant 0 : index
    %8 = vector.load %arg7[%c0_6, %c0_7] : memref<8x128xf32, #tpu.memory_space<vmem>>, vector<8x128xf32>
    tpu.vector_store %arg7[%c0_6, %c0_7], %7 {strides = array<i32>} : memref<8x128xf32, #tpu.memory_space<vmem>>, vector<8x128xf32>,
    %c0_i32_8 = arith.constant 0 : i32
    %9 = arith.cmpi eq, %arg2, %c0_i32_8 : i32
    %10 = arith.extui %9 : i1 to i32
    %c0_i32_9 = arith.constant 0 : i32
    %11 = arith.cmpi ne, %10, %c0_i32_9 : i32
    scf.if %11 {
      %c0_10 = arith.constant 0 : index
      %c0_11 = arith.constant 0 : index
      %12 = vector.load %arg7[%c0_10, %c0_11] : memref<8x128xf32, #tpu.memory_space<vmem>>, vector<8x128xf32>
      %c0_12 = arith.constant 0 : index
      %c0_13 = arith.constant 0 : index
      %13 = vector.load %arg5[%c0_12, %c0_13] : memref<1x128xf32, #tpu.memory_space<vmem>>, vector<1x128xf32>
      %14 = vector.broadcast %13 : vector<1x128xf32> to vector<8x128xf32>
      %15 = arith.addf %12, %14 : vector<8x128xf32>
      %c0_14 = arith.constant 0 : index
      %c0_15 = arith.constant 0 : index
      %16 = vector.load %arg6[%c0_14, %c0_15] : memref<8x128xf32, #tpu.memory_space<vmem>>, vector<8x128xf32>
      tpu.vector_store %arg6[%c0_14, %c0_15], %15 {strides = array<i32>} : memref<8x128xf32, #tpu.memory_space<vmem>>, vector<8x128xf32>,
    } else {
    }
    return
  }
  func.func @transform_0(%arg0: i32, %arg1: i32, %arg2: i32) -> (i32, i32) {
    %c0_i32 = arith.constant 0 : i32
    return %arg0, %arg2 : i32, i32
  }
  func.func @transform_1(%arg0: i32, %arg1: i32, %arg2: i32) -> (i32, i32) {
    %c0_i32 = arith.constant 0 : i32
    return %arg2, %arg1 : i32, i32
  }
  func.func @transform_2(%arg0: i32, %arg1: i32, %arg2: i32) -> (i32, i32) {
    %c0_i32 = arith.constant 0 : i32
    %c0_i32_0 = arith.constant 0 : i32
    return %c0_i32, %arg1 : i32, i32
  }
  func.func @transform_3(%arg0: i32, %arg1: i32, %arg2: i32) -> (i32, i32) {
    %c0_i32 = arith.constant 0 : i32
    return %arg0, %arg1 : i32, i32
  }
}

module attributes {stable_mosaic.version = 11 : i64} {
  func.func @_linear_kernel(%arg0: i32, %arg1: i32, %arg2: i32, %arg3: memref<8x128xbf16, #tpu.memory_space<vmem>>, %arg4: memref<128x128xbf16, #tpu.memory_space<vmem>>, %arg5: memref<1x128xf32, #tpu.memory_space<vmem>>, %arg6: memref<8x128xf32, #tpu.memory_space<vmem>>, %arg7: memref<8x128xf32, #tpu.memory_space<vmem>>) attributes {dimension_semantics = [#tpu.dimension_semantics<parallel>, #tpu.dimension_semantics<parallel>, #tpu.dimension_semantics<arbitrary>], iteration_bounds = array<i64: 1, 1, 1>, scalar_prefetch = 0 : i64, scratch_operands = 1 : i64, tpu.core_type = #tpu.core_type<tc>, window_params = [{transform_indices = @transform_0, window_bounds = array<i64: 8, 128>}, {transform_indices = @transform_1, window_bounds = array<i64: 128, 128>}, {transform_indices = @transform_2, window_bounds = array<i64: 1, 128>}, {transform_indices = @transform_3, window_bounds = array<i64: 8, 128>}]} {
    %c0_i32 = arith.constant 0 : i32
    %0 = arith.cmpi eq, %arg2, %c0_i32 : i32
    %1 = arith.extui %0 : i1 to i32
    %c0_i32_0 = arith.constant 0 : i32
    %2 = arith.cmpi ne, %1, %c0_i32_0 : i32
    scf.if %2 {
      %cst_10 = arith.constant 0.000000e+00 : f32
      %12 = vector.broadcast %cst_10 : f32 to vector<8x128xf32>
      %c0_11 = arith.constant 0 : index
      %c0_12 = arith.constant 0 : index
      %13 = vector.load %arg7[%c0_11, %c0_12] : memref<8x128xf32, #tpu.memory_space<vmem>>, vector<8x128xf32>
      tpu.vector_store %arg7[%c0_11, %c0_12], %12 {strides = array<i32>} : memref<8x128xf32, #tpu.memory_space<vmem>>, vector<8x128xf32>,
    } else {
    }
    %c0 = arith.constant 0 : index
    %c0_1 = arith.constant 0 : index
    %3 = vector.load %arg7[%c0, %c0_1] : memref<8x128xf32, #tpu.memory_space<vmem>>, vector<8x128xf32>
    %c0_2 = arith.constant 0 : index
    %c0_3 = arith.constant 0 : index
    %4 = vector.load %arg3[%c0_2, %c0_3] : memref<8x128xbf16, #tpu.memory_space<vmem>>, vector<8x128xbf16>
    %c0_4 = arith.constant 0 : index
    %c0_5 = arith.constant 0 : index
    %5 = vector.load %arg4[%c0_4, %c0_5] : memref<128x128xbf16, #tpu.memory_space<vmem>>, vector<128x128xbf16>
    %cst = arith.constant dense<0.000000e+00> : vector<8x128xf32>
    %6 = tpu.matmul %4, %5, %cst {dimension_numbers = #tpu.dot_dimension_numbers<[1], [0], [0], [1], [0, 0, 1, 1], [], []>} : vector<8x128xbf16>, vector<128x128xbf16>, vector<8x128xf32> -> vector<8x128xf32>
    %7 = arith.addf %3, %6 : vector<8x128xf32>
    %c0_6 = arith.constant 0 : index
    %c0_7 = arith.constant 0 : index
    %8 = vector.load %arg7[%c0_6, %c0_7] : memref<8x128xf32, #tpu.memory_space<vmem>>, vector<8x128xf32>
    tpu.vector_store %arg7[%c0_6, %c0_7], %7 {strides = array<i32>} : memref<8x128xf32, #tpu.memory_space<vmem>>, vector<8x128xf32>,
    %c0_i32_8 = arith.constant 0 : i32
    %9 = arith.cmpi eq, %arg2, %c0_i32_8 : i32
    %10 = arith.extui %9 : i1 to i32
    %c0_i32_9 = arith.constant 0 : i32
    %11 = arith.cmpi ne, %10, %c0_i32_9 : i32
    scf.if %11 {
      %c0_10 = arith.constant 0 : index
      %c0_11 = arith.constant 0 : index
      %12 = vector.load %arg7[%c0_10, %c0_11] : memref<8x128xf32, #tpu.memory_space<vmem>>, vector<8x128xf32>
      %c0_12 = arith.constant 0 : index
      %c0_13 = arith.constant 0 : index
      %13 = vector.load %arg5[%c0_12, %c0_13] : memref<1x128xf32, #tpu.memory_space<vmem>>, vector<1x128xf32>
      %14 = vector.broadcast %13 : vector<1x128xf32> to vector<8x128xf32>
      %15 = arith.addf %12, %14 : vector<8x128xf32>
      %c0_14 = arith.constant 0 : index
      %c0_15 = arith.constant 0 : index
      %16 = vector.load %arg6[%c0_14, %c0_15] : memref<8x128xf32, #tpu.memory_space<vmem>>, vector<8x128xf32>
      tpu.vector_store %arg6[%c0_14, %c0_15], %15 {strides = array<i32>} : memref<8x128xf32, #tpu.memory_space<vmem>>, vector<8x128xf32>,
    } else {
    }
    return
  }
  func.func @transform_0(%arg0: i32, %arg1: i32, %arg2: i32) -> (i32, i32) {
    %c0_i32 = arith.constant 0 : i32
    return %arg0, %arg2 : i32, i32
  }
  func.func @transform_1(%arg0: i32, %arg1: i32, %arg2: i32) -> (i32, i32) {
    %c0_i32 = arith.constant 0 : i32
    return %arg2, %arg1 : i32, i32
  }
  func.func @transform_2(%arg0: i32, %arg1: i32, %arg2: i32) -> (i32, i32) {
    %c0_i32 = arith.constant 0 : i32
    %c0_i32_0 = arith.constant 0 : i32
    return %c0_i32, %arg1 : i32, i32
  }
  func.func @transform_3(%arg0: i32, %arg1: i32, %arg2: i32) -> (i32, i32) {
    %c0_i32 = arith.constant 0 : i32
    return %arg0, %arg1 : i32, i32
  }
}

module attributes {stable_mosaic.version = 11 : i64} {
  func.func @_mlp_head_kernel(%arg0: i32, %arg1: i32, %arg2: memref<8x256xbf16, #tpu.memory_space<vmem>>, %arg3: memref<1x256x256xbf16, #tpu.memory_space<vmem>>, %arg4: memref<1x1x256xf32, #tpu.memory_space<vmem>>, %arg5: memref<1x256xf32, #tpu.memory_space<vmem>>, %arg6: memref<1x1xf32, #tpu.memory_space<vmem>>, %arg7: memref<8x128xf32, #tpu.memory_space<vmem>>, %arg8: memref<8x256xbf16, #tpu.memory_space<vmem>>) attributes {dimension_semantics = [#tpu.dimension_semantics<parallel>, #tpu.dimension_semantics<arbitrary>], iteration_bounds = array<i64: 1, 3>, scalar_prefetch = 0 : i64, scratch_operands = 1 : i64, tpu.core_type = #tpu.core_type<tc>, window_params = [{transform_indices = @transform_0, window_bounds = array<i64: 8, 256>}, {transform_indices = @transform_1, window_bounds = array<i64: 1, 256, 256>}, {transform_indices = @transform_2, window_bounds = array<i64: 1, 1, 256>}, {pipeline_mode = #tpu.pipeline_mode<synchronous>, transform_indices = @transform_3, window_bounds = array<i64: 1, 256>}, {pipeline_mode = #tpu.pipeline_mode<synchronous>, transform_indices = @transform_4, window_bounds = array<i64: 1, 1>}, {transform_indices = @transform_5, window_bounds = array<i64: 8, 128>}]} {
    %c0_i32 = arith.constant 0 : i32
    %0 = arith.cmpi eq, %arg1, %c0_i32 : i32
    %1 = arith.extui %0 : i1 to i32
    %c0_i32_0 = arith.constant 0 : i32
    %2 = arith.cmpi ne, %1, %c0_i32_0 : i32
    scf.if %2 {
      %c0_13 = arith.constant 0 : index
      %c0_14 = arith.constant 0 : index
      %22 = vector.load %arg2[%c0_13, %c0_14] : memref<8x256xbf16, #tpu.memory_space<vmem>>, vector<8x256xbf16>
      %c0_15 = arith.constant 0 : index
      %c0_16 = arith.constant 0 : index
      %23 = vector.load %arg8[%c0_15, %c0_16] : memref<8x256xbf16, #tpu.memory_space<vmem>>, vector<8x256xbf16>
      tpu.vector_store %arg8[%c0_15, %c0_16], %22 {strides = array<i32>} : memref<8x256xbf16, #tpu.memory_space<vmem>>, vector<8x256xbf16>,
    } else {
    }
    %c0 = arith.constant 0 : index
    %c0_1 = arith.constant 0 : index
    %3 = vector.load %arg8[%c0, %c0_1] : memref<8x256xbf16, #tpu.memory_space<vmem>>, vector<8x256xbf16>
    %c0_2 = arith.constant 0 : index
    %c0_3 = arith.constant 0 : index
    %c0_4 = arith.constant 0 : index
    %4 = vector.load %arg3[%c0_2, %c0_3, %c0_4] : memref<1x256x256xbf16, #tpu.memory_space<vmem>>, vector<1x256x256xbf16>
    %5 = vector.shape_cast %4 : vector<1x256x256xbf16> to vector<256x256xbf16>
    %cst = arith.constant dense<0.000000e+00> : vector<8x256xf32>
    %6 = tpu.matmul %3, %5, %cst {dimension_numbers = #tpu.dot_dimension_numbers<[1], [0], [0], [1], [0, 0, 1, 1], [], []>} : vector<8x256xbf16>, vector<256x256xbf16>, vector<8x256xf32> -> vector<8x256xf32>
    %c0_5 = arith.constant 0 : index
    %c0_6 = arith.constant 0 : index
    %c0_7 = arith.constant 0 : index
    %7 = vector.load %arg4[%c0_5, %c0_6, %c0_7] : memref<1x1x256xf32, #tpu.memory_space<vmem>>, vector<1x1x256xf32>
    %8 = vector.shape_cast %7 : vector<1x1x256xf32> to vector<1x256xf32>
    %9 = vector.broadcast %8 : vector<1x256xf32> to vector<8x256xf32>
    %10 = arith.addf %6, %9 : vector<8x256xf32>
    %cst_8 = arith.constant 0.000000e+00 : f32
    %11 = vector.broadcast %cst_8 : f32 to vector<8x256xf32>
    %12 = arith.cmpf oge, %10, %11 : vector<8x256xf32>
    %cst_9 = arith.constant 0.00999999977 : f32
    %13 = vector.broadcast %cst_9 : f32 to vector<8x256xf32>
    %14 = arith.mulf %13, %10 : vector<8x256xf32>
    %15 = arith.select %12, %10, %14 : vector<8x256xi1>, vector<8x256xf32>
    %c2_i32 = arith.constant 2 : i32
    %16 = arith.cmpi slt, %arg1, %c2_i32 : i32
    %17 = arith.extui %16 : i1 to i32
    %c0_i32_10 = arith.constant 0 : i32
    %18 = arith.cmpi ne, %17, %c0_i32_10 : i32
    scf.if %18 {
      %22 = arith.truncf %15 : vector<8x256xf32> to vector<8x256xbf16>
      %c0_13 = arith.constant 0 : index
      %c0_14 = arith.constant 0 : index
      %23 = vector.load %arg8[%c0_13, %c0_14] : memref<8x256xbf16, #tpu.memory_space<vmem>>, vector<8x256xbf16>
      tpu.vector_store %arg8[%c0_13, %c0_14], %22 {strides = array<i32>} : memref<8x256xbf16, #tpu.memory_space<vmem>>, vector<8x256xbf16>,
    } else {
    }
    %c2_i32_11 = arith.constant 2 : i32
    %19 = arith.cmpi eq, %arg1, %c2_i32_11 : i32
    %20 = arith.extui %19 : i1 to i32
    %c0_i32_12 = arith.constant 0 : i32
    %21 = arith.cmpi ne, %20, %c0_i32_12 : i32
    scf.if %21 {
      %c0_13 = arith.constant 0 : index
      %c0_14 = arith.constant 0 : index
      %22 = vector.load %arg5[%c0_13, %c0_14] : memref<1x256xf32, #tpu.memory_space<vmem>>, vector<1x256xf32>
      %23 = vector.broadcast %22 : vector<1x256xf32> to vector<8x256xf32>
      %24 = arith.mulf %15, %23 : vector<8x256xf32>
      %cst_15 = arith.constant dense<0.000000e+00> : vector<8xf32>
      %25 = vector.multi_reduction <add>, %24, %cst_15 [1] : vector<8x256xf32> to vector<8xf32>
      %26 = vector.shape_cast %25 : vector<8xf32> to vector<8x1xf32>
      %c0_16 = arith.constant 0 : index
      %c0_17 = arith.constant 0 : index
      %27 = vector.load %arg6[%c0_16, %c0_17] : memref<1x1xf32, #tpu.memory_space<vmem>>, vector<1x1xf32>
      %28 = vector.broadcast %27 : vector<1x1xf32> to vector<8x1xf32>
      %29 = arith.addf %26, %28 : vector<8x1xf32>
      %30 = math.absf %29 : vector<8x1xf32>
      %cst_18 = arith.constant 0.000000e+00 : f32
      %31 = vector.broadcast %cst_18 : f32 to vector<8x1xf32>
      %32 = arith.subf %31, %30 : vector<8x1xf32>
      %33 = math.exp %32 : vector<8x1xf32>
      %cst_19 = arith.constant 0.000000e+00 : f32
      %34 = vector.broadcast %cst_19 : f32 to vector<8x1xf32>
      %35 = arith.cmpf oge, %29, %34 : vector<8x1xf32>
      %cst_20 = arith.constant 1.000000e+00 : f32
      %36 = vector.broadcast %cst_20 : f32 to vector<8x1xf32>
      %37 = arith.addf %36, %33 : vector<8x1xf32>
      %cst_21 = arith.constant 1.000000e+00 : f32
      %38 = vector.broadcast %cst_21 : f32 to vector<8x1xf32>
      %39 = arith.divf %38, %37 : vector<8x1xf32>
      %cst_22 = arith.constant 1.000000e+00 : f32
      %40 = vector.broadcast %cst_22 : f32 to vector<8x1xf32>
      %41 = arith.addf %40, %33 : vector<8x1xf32>
      %42 = arith.divf %33, %41 : vector<8x1xf32>
      %43 = arith.select %35, %39, %42 : vector<8x1xi1>, vector<8x1xf32>
      %44 = vector.shape_cast %43 : vector<8x1xf32> to vector<8x1xf32>
      %45 = vector.broadcast %44 : vector<8x1xf32> to vector<8x128xf32>
      %c0_23 = arith.constant 0 : index
      %c0_24 = arith.constant 0 : index
      %46 = vector.load %arg7[%c0_23, %c0_24] : memref<8x128xf32, #tpu.memory_space<vmem>>, vector<8x128xf32>
      tpu.vector_store %arg7[%c0_23, %c0_24], %45 {strides = array<i32>} : memref<8x128xf32, #tpu.memory_space<vmem>>, vector<8x128xf32>,
    } else {
    }
    return
  }
  func.func @transform_0(%arg0: i32, %arg1: i32) -> (i32, i32) {
    %c0_i32 = arith.constant 0 : i32
    %c0_i32_0 = arith.constant 0 : i32
    return %arg0, %c0_i32 : i32, i32
  }
  func.func @transform_1(%arg0: i32, %arg1: i32) -> (i32, i32, i32) {
    %c0_i32 = arith.constant 0 : i32
    %c0_i32_0 = arith.constant 0 : i32
    %c0_i32_1 = arith.constant 0 : i32
    return %arg1, %c0_i32, %c0_i32_0 : i32, i32, i32
  }
  func.func @transform_2(%arg0: i32, %arg1: i32) -> (i32, i32, i32) {
    %c0_i32 = arith.constant 0 : i32
    %c0_i32_0 = arith.constant 0 : i32
    %c0_i32_1 = arith.constant 0 : i32
    return %arg1, %c0_i32, %c0_i32_0 : i32, i32, i32
  }
  func.func @transform_3(%arg0: i32, %arg1: i32) -> (i32, i32) {
    %c0_i32 = arith.constant 0 : i32
    %c0_i32_0 = arith.constant 0 : i32
    %c0_i32_1 = arith.constant 0 : i32
    return %c0_i32, %c0_i32_0 : i32, i32
  }
  func.func @transform_4(%arg0: i32, %arg1: i32) -> (i32, i32) {
    %c0_i32 = arith.constant 0 : i32
    %c0_i32_0 = arith.constant 0 : i32
    %c0_i32_1 = arith.constant 0 : i32
    return %c0_i32, %c0_i32_0 : i32, i32
  }
  func.func @transform_5(%arg0: i32, %arg1: i32) -> (i32, i32) {
    %c0_i32 = arith.constant 0 : i32
    %c0_i32_0 = arith.constant 0 : i32
    return %arg0, %c0_i32 : i32, i32
  }
}

</mosaic_0001>

<llo_original>
// kernel: selector_global_forward.5
$region0: #{selector_global_forward.5}
  #allocation0 [shape = 'u32[]', space=smem, size = 0x4, offset = 0x4, fixed_abs, tag = 'smem constant byte address 0x4 - core index']
  #allocation1 [shape = 'u32[72,128]{1,0:T(1,128)}', space=vmem, size = 0x9000, scoped, tag = 'internal scratch']
  #allocation2 [shape = 'f32[128,128]{1,0:T(8,128)}', space=vmem, size = 0x10000, scoped, tag = 'scratch operand']
  %s0 = inlined_call_operand.vmem [shape: bf16[128,128], index: 0, kind: input, shape index: {}]
  %s1 = inlined_call_operand.vmem [shape: bf16[128,128], index: 1, kind: input, shape index: {}]
  %s2 = inlined_call_operand.vmem [shape: f32[1,128], index: 2, kind: input, shape index: {}]
  %s3 = inlined_call_operand.vmem [shape: bf16[128,128], index: 3, kind: output, shape index: {}]
  %s4 = sld [smem:[#allocation0]]
  $region30: #{selector_global_forward.5} parent=0
    _
  %s6 = ssub.s32 1, %s4
  %s7 = scalar_select 0, %s6, %s4
  // Predicated region
  $region2: #{selector_global_forward.5} parent=0 // pred_check
    _
  $region3: #{selector_global_forward.5} parent=0 // pred_check_branch
    %9 = sbr.rel (0) target = $region5
  $region4: #{selector_global_forward.5} parent=0 // pred_region
    _
  $region5: #{selector_global_forward.5} parent=0 // pred_fallthru
    _
  // Predicated region
  $region6: #{selector_global_forward.5} parent=0 // pred_check
    _
  $region7: #{selector_global_forward.5} parent=0 // pred_check_branch
    %11 = sbr.rel (0) target = $region9
  $region8: #{selector_global_forward.5} parent=0 // pred_region
    _
  $region9: #{selector_global_forward.5} parent=0 // pred_fallthru
    _
  // Predicated region
  $region10: #{selector_global_forward.5} parent=0 // pred_check
    _
  $region11: #{selector_global_forward.5} parent=0 // pred_check_branch
    %13 = sbr.rel (0) target = $region13
  $region12: #{selector_global_forward.5} parent=0 // pred_region
    _
  $region13: #{selector_global_forward.5} parent=0 // pred_fallthru
    _
  %p14 = scmp.eq.s32.totalorder 0, 0
  // Predicated region
  $region14: #{selector_global_forward.5} parent=0 // pred_check
    %p15 = pneg %p14
  $region15: #{selector_global_forward.5} parent=0 // pred_check_branch
    %17 = sbr.rel (%p15) target = $region17
  $region16: #{selector_global_forward.5} parent=0 // pred_region
    %18 = vst [vmem:[#allocation2] sm:$0xff] 0.0
    %19 = vst [vmem:[#allocation2 + $0x8] sm:$0xff] 0.0
    %20 = vst [vmem:[#allocation2 + $0x10] sm:$0xff] 0.0
    %21 = vst [vmem:[#allocation2 + $0x18] sm:$0xff] 0.0
    %22 = vst [vmem:[#allocation2 + $0x20] sm:$0xff] 0.0
    %23 = vst [vmem:[#allocation2 + $0x28] sm:$0xff] 0.0
    %24 = vst [vmem:[#allocation2 + $0x30] sm:$0xff] 0.0
    %25 = vst [vmem:[#allocation2 + $0x38] sm:$0xff] 0.0
    %26 = vst [vmem:[#allocation2 + $0x40] sm:$0xff] 0.0
    %27 = vst [vmem:[#allocation2 + $0x48] sm:$0xff] 0.0
    %28 = vst [vmem:[#allocation2 + $0x50] sm:$0xff] 0.0
    %29 = vst [vmem:[#allocation2 + $0x58] sm:$0xff] 0.0
    %30 = vst [vmem:[#allocation2 + $0x60] sm:$0xff] 0.0
    %31 = vst [vmem:[#allocation2 + $0x68] sm:$0xff] 0.0
    %32 = vst [vmem:[#allocation2 + $0x70] sm:$0xff] 0.0
    %33 = vst [vmem:[#allocation2 + $0x78] sm:$0xff] 0.0
  $region17: #{selector_global_forward.5} parent=0 // pred_fallthru
    _
  %v34 = vld [vmem:[#allocation2] sm:$0xff]
  %v35 = vld [vmem:[#allocation2 + $0x8] sm:$0xff]
  %v36 = vld [vmem:[#allocation2 + $0x10] sm:$0xff]
  %v37 = vld [vmem:[#allocation2 + $0x18] sm:$0xff]
  %v38 = vld [vmem:[#allocation2 + $0x20] sm:$0xff]
  %v39 = vld [vmem:[#allocation2 + $0x28] sm:$0xff]
  %v40 = vld [vmem:[#allocation2 + $0x30] sm:$0xff]
  %v41 = vld [vmem:[#allocation2 + $0x38] sm:$0xff]
  %v42 = vld [vmem:[#allocation2 + $0x40] sm:$0xff]
  %v43 = vld [vmem:[#allocation2 + $0x48] sm:$0xff]
  %v44 = vld [vmem:[#allocation2 + $0x50] sm:$0xff]
  %v45 = vld [vmem:[#allocation2 + $0x58] sm:$0xff]
  %v46 = vld [vmem:[#allocation2 + $0x60] sm:$0xff]
  %v47 = vld [vmem:[#allocation2 + $0x68] sm:$0xff]
  %v48 = vld [vmem:[#allocation2 + $0x70] sm:$0xff]
  %v49 = vld [vmem:[#allocation2 + $0x78] sm:$0xff]
  %v50 = vld [vmem:[%s0] sm:$0xf]
  %v51 = vld [vmem:[%s0 + $0x4] sm:$0xf]
  %v52 = vld [vmem:[%s0 + $0x8] sm:$0xf]
  %v53 = vld [vmem:[%s0 + $0xc] sm:$0xf]
  %v54 = vld [vmem:[%s0 + $0x10] sm:$0xf]
  %v55 = vld [vmem:[%s0 + $0x14] sm:$0xf]
  %v56 = vld [vmem:[%s0 + $0x18] sm:$0xf]
  %v57 = vld [vmem:[%s0 + $0x1c] sm:$0xf]
  %v58 = vld [vmem:[%s0 + $0x20] sm:$0xf]
  %v59 = vld [vmem:[%s0 + $0x24] sm:$0xf]
  %v60 = vld [vmem:[%s0 + $0x28] sm:$0xf]
  %v61 = vld [vmem:[%s0 + $0x2c] sm:$0xf]
  %v62 = vld [vmem:[%s0 + $0x30] sm:$0xf]
  %v63 = vld [vmem:[%s0 + $0x34] sm:$0xf]
  %v64 = vld [vmem:[%s0 + $0x38] sm:$0xf]
  %v65 = vld [vmem:[%s0 + $0x3c] sm:$0xf]
  %v66 = vld [vmem:[%s1] sm:$0xf]
  %v67 = vld [vmem:[%s1 + $0x4] sm:$0xf]
  %v68 = vld [vmem:[%s1 + $0x8] sm:$0xf]
  %v69 = vld [vmem:[%s1 + $0xc] sm:$0xf]
  %v70 = vld [vmem:[%s1 + $0x10] sm:$0xf]
  %v71 = vld [vmem:[%s1 + $0x14] sm:$0xf]
  %v72 = vld [vmem:[%s1 + $0x18] sm:$0xf]
  %v73 = vld [vmem:[%s1 + $0x1c] sm:$0xf]
  %v74 = vld [vmem:[%s1 + $0x20] sm:$0xf]
  %v75 = vld [vmem:[%s1 + $0x24] sm:$0xf]
  %v76 = vld [vmem:[%s1 + $0x28] sm:$0xf]
  %v77 = vld [vmem:[%s1 + $0x2c] sm:$0xf]
  %v78 = vld [vmem:[%s1 + $0x30] sm:$0xf]
  %v79 = vld [vmem:[%s1 + $0x34] sm:$0xf]
  %v80 = vld [vmem:[%s1 + $0x38] sm:$0xf]
  %v81 = vld [vmem:[%s1 + $0x3c] sm:$0xf]
  %v98 = vunpack.c.l.b16 %v50
  %v99 = vunpack.c.l.b16 %v51
  %v100 = vunpack.c.l.b16 %v52
  %v101 = vunpack.c.l.b16 %v53
  %v102 = vunpack.c.l.b16 %v54
  %v103 = vunpack.c.l.b16 %v55
  %v104 = vunpack.c.l.b16 %v56
  %v105 = vunpack.c.l.b16 %v57
  %v106 = vunpack.c.l.b16 %v58
  %v107 = vunpack.c.l.b16 %v59
  %v108 = vunpack.c.l.b16 %v60
  %v109 = vunpack.c.l.b16 %v61
  %v110 = vunpack.c.l.b16 %v62
  %v111 = vunpack.c.l.b16 %v63
  %v112 = vunpack.c.l.b16 %v64
  %v113 = vunpack.c.l.b16 %v65
  %v114 = vpack.c.b16 %v99, %v98
  %v115 = vpack.c.b16 %v101, %v100
  %v116 = vpack.c.b16 %v103, %v102
  %v117 = vpack.c.b16 %v105, %v104
  %v118 = vpack.c.b16 %v107, %v106
  %v119 = vpack.c.b16 %v109, %v108
  %v120 = vpack.c.b16 %v111, %v110
  %v121 = vpack.c.b16 %v113, %v112
  %v146 = vunpack.c.l.b16 %v66
  %v147 = vunpack.c.l.b16 %v67
  %v148 = vunpack.c.l.b16 %v68
  %v149 = vunpack.c.l.b16 %v69
  %v150 = vunpack.c.l.b16 %v70
  %v151 = vunpack.c.l.b16 %v71
  %v152 = vunpack.c.l.b16 %v72
  %v153 = vunpack.c.l.b16 %v73
  %v154 = vunpack.c.l.b16 %v74
  %v155 = vunpack.c.l.b16 %v75
  %v156 = vunpack.c.l.b16 %v76
  %v157 = vunpack.c.l.b16 %v77
  %v158 = vunpack.c.l.b16 %v78
  %v159 = vunpack.c.l.b16 %v79
  %v160 = vunpack.c.l.b16 %v80
  %v161 = vunpack.c.l.b16 %v81
  %v162 = vpack.c.b16 %v147, %v146
  %v163 = vpack.c.b16 %v149, %v148
  %v164 = vpack.c.b16 %v151, %v150
  %v165 = vpack.c.b16 %v153, %v152
  %v166 = vpack.c.b16 %v155, %v154
  %v167 = vpack.c.b16 %v157, %v156
  %v168 = vpack.c.b16 %v159, %v158
  %v169 = vpack.c.b16 %v161, %v160
  %178 = vmatpush.bf16.msra.mxu0 %v169
  %179 = vmatpush.bf16.msra.mxu0 %v168
  %180 = vmatpush.bf16.msra.mxu0 %v167
  %181 = vmatpush.bf16.msra.mxu0 %v166
  %182 = vmatpush.bf16.msra.mxu0 %v165
  %183 = vmatpush.bf16.msra.mxu0 %v164
  %184 = vmatpush.bf16.msra.mxu0 %v163
  %185 = vmatpush.bf16.msra.mxu0 %v162
  %186 = vmatmul.bf16.gmra.mxu0 %v114
  %v187 = vpop.f32.mrf.mxu0
  %v188 = vadd.f32 0.0, %v187
  %v189 = vpop.f32.mrf.mxu0
  %v190 = vadd.f32 0.0, %v189
  %191 = vmatmul.bf16.gmra.mxu0 %v115
  %v192 = vpop.f32.mrf.mxu0
  %v193 = vadd.f32 0.0, %v192
  %v194 = vpop.f32.mrf.mxu0
  %v195 = vadd.f32 0.0, %v194
  %196 = vmatmul.bf16.gmra.mxu0 %v116
  %v197 = vpop.f32.mrf.mxu0
  %v198 = vadd.f32 0.0, %v197
  %v199 = vpop.f32.mrf.mxu0
  %v200 = vadd.f32 0.0, %v199
  %201 = vmatmul.bf16.gmra.mxu0 %v117
  %v202 = vpop.f32.mrf.mxu0
  %v203 = vadd.f32 0.0, %v202
  %v204 = vpop.f32.mrf.mxu0
  %v205 = vadd.f32 0.0, %v204
  %206 = vmatmul.bf16.gmra.mxu0 %v118
  %v207 = vpop.f32.mrf.mxu0
  %v208 = vadd.f32 0.0, %v207
  %v209 = vpop.f32.mrf.mxu0
  %v210 = vadd.f32 0.0, %v209
  %211 = vmatmul.bf16.gmra.mxu0 %v119
  %v212 = vpop.f32.mrf.mxu0
  %v213 = vadd.f32 0.0, %v212
  %v214 = vpop.f32.mrf.mxu0
  %v215 = vadd.f32 0.0, %v214
  %216 = vmatmul.bf16.gmra.mxu0 %v120
  %v217 = vpop.f32.mrf.mxu0
  %v218 = vadd.f32 0.0, %v217
  %v219 = vpop.f32.mrf.mxu0
  %v220 = vadd.f32 0.0, %v219
  %221 = vmatmul.bf16.gmra.mxu0 %v121
  %v222 = vpop.f32.mrf.mxu0
  %v223 = vadd.f32 0.0, %v222
  %v224 = vpop.f32.mrf.mxu0
  %v225 = vadd.f32 0.0, %v224
  %226 = vdwg.mxu0
  %v227 = vadd.f32 %v34, %v188
  %v228 = vadd.f32 %v35, %v190
  %v229 = vadd.f32 %v36, %v193
  %v230 = vadd.f32 %v37, %v195
  %v231 = vadd.f32 %v38, %v198
  %v232 = vadd.f32 %v39, %v200
  %v233 = vadd.f32 %v40, %v203
  %v234 = vadd.f32 %v41, %v205
  %v235 = vadd.f32 %v42, %v208
  %v236 = vadd.f32 %v43, %v210
  %v237 = vadd.f32 %v44, %v213
  %v238 = vadd.f32 %v45, %v215
  %v239 = vadd.f32 %v46, %v218
  %v240 = vadd.f32 %v47, %v220
  %v241 = vadd.f32 %v48, %v223
  %v242 = vadd.f32 %v49, %v225
  %243 = vst [vmem:[#allocation2] sm:$0xff] %v227
  %244 = vst [vmem:[#allocation2 + $0x8] sm:$0xff] %v228
  %245 = vst [vmem:[#allocation2 + $0x10] sm:$0xff] %v229
  %246 = vst [vmem:[#allocation2 + $0x18] sm:$0xff] %v230
  %247 = vst [vmem:[#allocation2 + $0x20] sm:$0xff] %v231
  %248 = vst [vmem:[#allocation2 + $0x28] sm:$0xff] %v232
  %249 = vst [vmem:[#allocation2 + $0x30] sm:$0xff] %v233
  %250 = vst [vmem:[#allocation2 + $0x38] sm:$0xff] %v234
  %251 = vst [vmem:[#allocation2 + $0x40] sm:$0xff] %v235
  %252 = vst [vmem:[#allocation2 + $0x48] sm:$0xff] %v236
  %253 = vst [vmem:[#allocation2 + $0x50] sm:$0xff] %v237
  %254 = vst [vmem:[#allocation2 + $0x58] sm:$0xff] %v238
  %255 = vst [vmem:[#allocation2 + $0x60] sm:$0xff] %v239
  %256 = vst [vmem:[#allocation2 + $0x68] sm:$0xff] %v240
  %257 = vst [vmem:[#allocation2 + $0x70] sm:$0xff] %v241
  %258 = vst [vmem:[#allocation2 + $0x78] sm:$0xff] %v242
  // Predicated region
  $region18: #{selector_global_forward.5} parent=0 // pred_check
    %p259 = pneg %p14
  $region19: #{selector_global_forward.5} parent=0 // pred_check_branch
    %261 = sbr.rel (%p259) target = $region21
  $region20: #{selector_global_forward.5} parent=0 // pred_region
    %v262 = vld [vmem:[#allocation2] sm:$0xff]
    %v263 = vld [vmem:[#allocation2 + $0x8] sm:$0xff]
    %v264 = vld [vmem:[#allocation2 + $0x10] sm:$0xff]
    %v265 = vld [vmem:[#allocation2 + $0x18] sm:$0xff]
    %v266 = vld [vmem:[#allocation2 + $0x20] sm:$0xff]
    %v267 = vld [vmem:[#allocation2 + $0x28] sm:$0xff]
    %v268 = vld [vmem:[#allocation2 + $0x30] sm:$0xff]
    %v269 = vld [vmem:[#allocation2 + $0x38] sm:$0xff]
    %v270 = vld [vmem:[#allocation2 + $0x40] sm:$0xff]
    %v271 = vld [vmem:[#allocation2 + $0x48] sm:$0xff]
    %v272 = vld [vmem:[#allocation2 + $0x50] sm:$0xff]
    %v273 = vld [vmem:[#allocation2 + $0x58] sm:$0xff]
    %v274 = vld [vmem:[#allocation2 + $0x60] sm:$0xff]
    %v275 = vld [vmem:[#allocation2 + $0x68] sm:$0xff]
    %v276 = vld [vmem:[#allocation2 + $0x70] sm:$0xff]
    %v277 = vld [vmem:[#allocation2 + $0x78] sm:$0xff]
    %v278 = vld [vmem:[%s2] sm:$0x1]
    %v280 = vperm.slane %v278, 0
    %v282 = vadd.f32 %v262, %v280
    %v283 = vadd.f32 %v263, %v280
    %v284 = vadd.f32 %v264, %v280
    %v285 = vadd.f32 %v265, %v280
    %v286 = vadd.f32 %v266, %v280
    %v287 = vadd.f32 %v267, %v280
    %v288 = vadd.f32 %v268, %v280
    %v289 = vadd.f32 %v269, %v280
    %v290 = vadd.f32 %v270, %v280
    %v291 = vadd.f32 %v271, %v280
    %v292 = vadd.f32 %v272, %v280
    %v293 = vadd.f32 %v273, %v280
    %v294 = vadd.f32 %v274, %v280
    %v295 = vadd.f32 %v275, %v280
    %v296 = vadd.f32 %v276, %v280
    %v297 = vadd.f32 %v277, %v280
    %vm298 = vcmp.ge.f32.partialorder %v282, 0.0
    %vm299 = vcmp.ge.f32.partialorder %v283, 0.0
    %vm300 = vcmp.ge.f32.partialorder %v284, 0.0
    %vm301 = vcmp.ge.f32.partialorder %v285, 0.0
    %vm302 = vcmp.ge.f32.partialorder %v286, 0.0
    %vm303 = vcmp.ge.f32.partialorder %v287, 0.0
    %vm304 = vcmp.ge.f32.partialorder %v288, 0.0
    %vm305 = vcmp.ge.f32.partialorder %v289, 0.0
    %vm306 = vcmp.ge.f32.partialorder %v290, 0.0
    %vm307 = vcmp.ge.f32.partialorder %v291, 0.0
    %vm308 = vcmp.ge.f32.partialorder %v292, 0.0
    %vm309 = vcmp.ge.f32.partialorder %v293, 0.0
    %vm310 = vcmp.ge.f32.partialorder %v294, 0.0
    %vm311 = vcmp.ge.f32.partialorder %v295, 0.0
    %vm312 = vcmp.ge.f32.partialorder %v296, 0.0
    %vm313 = vcmp.ge.f32.partialorder %v297, 0.0
    %v314 = vmul.f32 %v282, 0.01
    %v315 = vmul.f32 %v283, 0.01
    %v316 = vmul.f32 %v284, 0.01
    %v317 = vmul.f32 %v285, 0.01
    %v318 = vmul.f32 %v286, 0.01
    %v319 = vmul.f32 %v287, 0.01
    %v320 = vmul.f32 %v288, 0.01
    %v321 = vmul.f32 %v289, 0.01
    %v322 = vmul.f32 %v290, 0.01
    %v323 = vmul.f32 %v291, 0.01
    %v324 = vmul.f32 %v292, 0.01
    %v325 = vmul.f32 %v293, 0.01
    %v326 = vmul.f32 %v294, 0.01
    %v327 = vmul.f32 %v295, 0.01
    %v328 = vmul.f32 %v296, 0.01
    %v329 = vmul.f32 %v297, 0.01
    %v330 = vsel %vm298, %v282, %v314
    %v331 = vsel %vm299, %v283, %v315
    %v332 = vsel %vm300, %v284, %v316
    %v333 = vsel %vm301, %v285, %v317
    %v334 = vsel %vm302, %v286, %v318
    %v335 = vsel %vm303, %v287, %v319
    %v336 = vsel %vm304, %v288, %v320
    %v337 = vsel %vm305, %v289, %v321
    %v338 = vsel %vm306, %v290, %v322
    %v339 = vsel %vm307, %v291, %v323
    %v340 = vsel %vm308, %v292, %v324
    %v341 = vsel %vm309, %v293, %v325
    %v342 = vsel %vm310, %v294, %v326
    %v343 = vsel %vm311, %v295, %v327
    %v344 = vsel %vm312, %v296, %v328
    %v345 = vsel %vm313, %v297, %v329
    %v346 = vpack.c.bf16 %v330, %v330
    %v347 = vpack.c.bf16 %v331, %v331
    %v348 = vpack.c.bf16 %v332, %v332
    %v349 = vpack.c.bf16 %v333, %v333
    %v350 = vpack.c.bf16 %v334, %v334
    %v351 = vpack.c.bf16 %v335, %v335
    %v352 = vpack.c.bf16 %v336, %v336
    %v353 = vpack.c.bf16 %v337, %v337
    %v354 = vpack.c.bf16 %v338, %v338
    %v355 = vpack.c.bf16 %v339, %v339
    %v356 = vpack.c.bf16 %v340, %v340
    %v357 = vpack.c.bf16 %v341, %v341
    %v358 = vpack.c.bf16 %v342, %v342
    %v359 = vpack.c.bf16 %v343, %v343
    %v360 = vpack.c.bf16 %v344, %v344
    %v361 = vpack.c.bf16 %v345, %v345
    %362 = vst [vmem:[%s3] sm:$0xf] %v346
    %363 = vst [vmem:[%s3 + $0x4] sm:$0xf] %v347
    %364 = vst [vmem:[%s3 + $0x8] sm:$0xf] %v348
    %365 = vst [vmem:[%s3 + $0xc] sm:$0xf] %v349
    %366 = vst [vmem:[%s3 + $0x10] sm:$0xf] %v350
    %367 = vst [vmem:[%s3 + $0x14] sm:$0xf] %v351
    %368 = vst [vmem:[%s3 + $0x18] sm:$0xf] %v352
    %369 = vst [vmem:[%s3 + $0x1c] sm:$0xf] %v353
    %370 = vst [vmem:[%s3 + $0x20] sm:$0xf] %v354
    %371 = vst [vmem:[%s3 + $0x24] sm:$0xf] %v355
    %372 = vst [vmem:[%s3 + $0x28] sm:$0xf] %v356
    %373 = vst [vmem:[%s3 + $0x2c] sm:$0xf] %v357
    %374 = vst [vmem:[%s3 + $0x30] sm:$0xf] %v358
    %375 = vst [vmem:[%s3 + $0x34] sm:$0xf] %v359
    %376 = vst [vmem:[%s3 + $0x38] sm:$0xf] %v360
    %377 = vst [vmem:[%s3 + $0x3c] sm:$0xf] %v361
  $region21: #{selector_global_forward.5} parent=0 // pred_fallthru
    _
  // Predicated region
  $region22: #{selector_global_forward.5} parent=0 // pred_check
    _
  $region23: #{selector_global_forward.5} parent=0 // pred_check_branch
    %379 = sbr.rel (0) target = $region25
  $region24: #{selector_global_forward.5} parent=0 // pred_region
    _
  $region25: #{selector_global_forward.5} parent=0 // pred_fallthru
    _
  // Predicated region
  $region26: #{selector_global_forward.5} parent=0 // pred_check
    _
  $region27: #{selector_global_forward.5} parent=0 // pred_check_branch
    %381 = sbr.rel (0) target = $region29
  $region28: #{selector_global_forward.5} parent=0 // pred_region
    _
  $region29: #{selector_global_forward.5} parent=0 // pred_fallthru
    _

// kernel: selector_global_forward.6
$region0: #{selector_global_forward.6}
  #allocation0 [shape = 'u32[]', space=smem, size = 0x4, offset = 0x4, fixed_abs, tag = 'smem constant byte address 0x4 - core index']
  #allocation1 [shape = 'u32[72,128]{1,0:T(1,128)}', space=vmem, size = 0x9000, scoped, tag = 'internal scratch']
  #allocation2 [shape = 'f32[16,128]{1,0:T(8,128)}', space=vmem, size = 0x2000, scoped, tag = 'scratch operand']
  %s0 = inlined_call_operand.vmem [shape: bf16[16,256], index: 0, kind: input, shape index: {}]
  %s1 = inlined_call_operand.vmem [shape: bf16[256,128], index: 1, kind: input, shape index: {}]
  %s2 = inlined_call_operand.vmem [shape: f32[1,128], index: 2, kind: input, shape index: {}]
  %s3 = inlined_call_operand.vmem [shape: bf16[16,128], index: 3, kind: output, shape index: {}]
  %s4 = sld [smem:[#allocation0]]
  $region30: #{selector_global_forward.6} parent=0
    _
  %s6 = ssub.s32 1, %s4
  %s7 = scalar_select 0, %s6, %s4
  // Predicated region
  $region2: #{selector_global_forward.6} parent=0 // pred_check
    _
  $region3: #{selector_global_forward.6} parent=0 // pred_check_branch
    %9 = sbr.rel (0) target = $region5
  $region4: #{selector_global_forward.6} parent=0 // pred_region
    _
  $region5: #{selector_global_forward.6} parent=0 // pred_fallthru
    _
  // Predicated region
  $region6: #{selector_global_forward.6} parent=0 // pred_check
    _
  $region7: #{selector_global_forward.6} parent=0 // pred_check_branch
    %11 = sbr.rel (0) target = $region9
  $region8: #{selector_global_forward.6} parent=0 // pred_region
    _
  $region9: #{selector_global_forward.6} parent=0 // pred_fallthru
    _
  // Predicated region
  $region10: #{selector_global_forward.6} parent=0 // pred_check
    _
  $region11: #{selector_global_forward.6} parent=0 // pred_check_branch
    %13 = sbr.rel (0) target = $region13
  $region12: #{selector_global_forward.6} parent=0 // pred_region
    _
  $region13: #{selector_global_forward.6} parent=0 // pred_fallthru
    _
  %p14 = scmp.eq.s32.totalorder 0, 0
  // Predicated region
  $region14: #{selector_global_forward.6} parent=0 // pred_check
    %p15 = pneg %p14
  $region15: #{selector_global_forward.6} parent=0 // pred_check_branch
    %17 = sbr.rel (%p15) target = $region17
  $region16: #{selector_global_forward.6} parent=0 // pred_region
    %18 = vst [vmem:[#allocation2] sm:$0xff] 0.0
    %19 = vst [vmem:[#allocation2 + $0x8] sm:$0xff] 0.0
  $region17: #{selector_global_forward.6} parent=0 // pred_fallthru
    _
  %v20 = vld [vmem:[#allocation2] sm:$0xff]
  %v21 = vld [vmem:[#allocation2 + $0x8] sm:$0xff]
  %v22 = vld [vmem:[%s0] sm:$0xff]
  %v23 = vld [vmem:[%s0 + $0x8] sm:$0xff]
  %v24 = vld [vmem:[%s1] sm:$0xf]
  %v25 = vld [vmem:[%s1 + $0x4] sm:$0xf]
  %v26 = vld [vmem:[%s1 + $0x8] sm:$0xf]
  %v27 = vld [vmem:[%s1 + $0xc] sm:$0xf]
  %v28 = vld [vmem:[%s1 + $0x10] sm:$0xf]
  %v29 = vld [vmem:[%s1 + $0x14] sm:$0xf]
  %v30 = vld [vmem:[%s1 + $0x18] sm:$0xf]
  %v31 = vld [vmem:[%s1 + $0x1c] sm:$0xf]
  %v32 = vld [vmem:[%s1 + $0x20] sm:$0xf]
  %v33 = vld [vmem:[%s1 + $0x24] sm:$0xf]
  %v34 = vld [vmem:[%s1 + $0x28] sm:$0xf]
  %v35 = vld [vmem:[%s1 + $0x2c] sm:$0xf]
  %v36 = vld [vmem:[%s1 + $0x30] sm:$0xf]
  %v37 = vld [vmem:[%s1 + $0x34] sm:$0xf]
  %v38 = vld [vmem:[%s1 + $0x38] sm:$0xf]
  %v39 = vld [vmem:[%s1 + $0x3c] sm:$0xf]
  %v40 = vld [vmem:[%s1 + $0x40] sm:$0xf]
  %v41 = vld [vmem:[%s1 + $0x44] sm:$0xf]
  %v42 = vld [vmem:[%s1 + $0x48] sm:$0xf]
  %v43 = vld [vmem:[%s1 + $0x4c] sm:$0xf]
  %v44 = vld [vmem:[%s1 + $0x50] sm:$0xf]
  %v45 = vld [vmem:[%s1 + $0x54] sm:$0xf]
  %v46 = vld [vmem:[%s1 + $0x58] sm:$0xf]
  %v47 = vld [vmem:[%s1 + $0x5c] sm:$0xf]
  %v48 = vld [vmem:[%s1 + $0x60] sm:$0xf]
  %v49 = vld [vmem:[%s1 + $0x64] sm:$0xf]
  %v50 = vld [vmem:[%s1 + $0x68] sm:$0xf]
  %v51 = vld [vmem:[%s1 + $0x6c] sm:$0xf]
  %v52 = vld [vmem:[%s1 + $0x70] sm:$0xf]
  %v53 = vld [vmem:[%s1 + $0x74] sm:$0xf]
  %v54 = vld [vmem:[%s1 + $0x78] sm:$0xf]
  %v55 = vld [vmem:[%s1 + $0x7c] sm:$0xf]
  %v58 = vunpack.c.l.b16 %v22
  %v59 = vunpack.c.h.b16 %v22
  %v60 = vunpack.c.l.b16 %v23
  %v61 = vunpack.c.h.b16 %v23
  %v62 = vpack.c.b16 %v60, %v58
  %v63 = vpack.c.b16 %v61, %v59
  %v98 = vunpack.c.l.b16 %v24
  %v99 = vunpack.c.l.b16 %v25
  %v100 = vunpack.c.l.b16 %v26
  %v101 = vunpack.c.l.b16 %v27
  %v102 = vunpack.c.l.b16 %v28
  %v103 = vunpack.c.l.b16 %v29
  %v104 = vunpack.c.l.b16 %v30
  %v105 = vunpack.c.l.b16 %v31
  %v106 = vunpack.c.l.b16 %v32
  %v107 = vunpack.c.l.b16 %v33
  %v108 = vunpack.c.l.b16 %v34
  %v109 = vunpack.c.l.b16 %v35
  %v110 = vunpack.c.l.b16 %v36
  %v111 = vunpack.c.l.b16 %v37
  %v112 = vunpack.c.l.b16 %v38
  %v113 = vunpack.c.l.b16 %v39
  %v114 = vunpack.c.l.b16 %v40
  %v115 = vunpack.c.l.b16 %v41
  %v116 = vunpack.c.l.b16 %v42
  %v117 = vunpack.c.l.b16 %v43
  %v118 = vunpack.c.l.b16 %v44
  %v119 = vunpack.c.l.b16 %v45
  %v120 = vunpack.c.l.b16 %v46
  %v121 = vunpack.c.l.b16 %v47
  %v122 = vunpack.c.l.b16 %v48
  %v123 = vunpack.c.l.b16 %v49
  %v124 = vunpack.c.l.b16 %v50
  %v125 = vunpack.c.l.b16 %v51
  %v126 = vunpack.c.l.b16 %v52
  %v127 = vunpack.c.l.b16 %v53
  %v128 = vunpack.c.l.b16 %v54
  %v129 = vunpack.c.l.b16 %v55
  %v130 = vpack.c.b16 %v99, %v98
  %v131 = vpack.c.b16 %v101, %v100
  %v132 = vpack.c.b16 %v103, %v102
  %v133 = vpack.c.b16 %v105, %v104
  %v134 = vpack.c.b16 %v107, %v106
  %v135 = vpack.c.b16 %v109, %v108
  %v136 = vpack.c.b16 %v111, %v110
  %v137 = vpack.c.b16 %v113, %v112
  %v138 = vpack.c.b16 %v115, %v114
  %v139 = vpack.c.b16 %v117, %v116
  %v140 = vpack.c.b16 %v119, %v118
  %v141 = vpack.c.b16 %v121, %v120
  %v142 = vpack.c.b16 %v123, %v122
  %v143 = vpack.c.b16 %v125, %v124
  %v144 = vpack.c.b16 %v127, %v126
  %v145 = vpack.c.b16 %v129, %v128
  %162 = vmatpush.bf16.msra.mxu0 %v137
  %163 = vmatpush.bf16.msra.mxu0 %v136
  %164 = vmatpush.bf16.msra.mxu0 %v135
  %165 = vmatpush.bf16.msra.mxu0 %v134
  %166 = vmatpush.bf16.msra.mxu0 %v133
  %167 = vmatpush.bf16.msra.mxu0 %v132
  %168 = vmatpush.bf16.msra.mxu0 %v131
  %169 = vmatpush.bf16.msra.mxu0 %v130
  %170 = vmatmul.bf16.gmra.mxu0 %v62
  %v171 = vpop.f32.mrf.mxu0
  %v172 = vadd.f32 0.0, %v171
  %v173 = vpop.f32.mrf.mxu0
  %v174 = vadd.f32 0.0, %v173
  %175 = vdwg.mxu0
  %176 = vmatpush.bf16.msra.mxu0 %v145
  %177 = vmatpush.bf16.msra.mxu0 %v144
  %178 = vmatpush.bf16.msra.mxu0 %v143
  %179 = vmatpush.bf16.msra.mxu0 %v142
  %180 = vmatpush.bf16.msra.mxu0 %v141
  %181 = vmatpush.bf16.msra.mxu0 %v140
  %182 = vmatpush.bf16.msra.mxu0 %v139
  %183 = vmatpush.bf16.msra.mxu0 %v138
  %184 = vmatmul.bf16.gmra.mxu0 %v63
  %v185 = vpop.f32.mrf.mxu0
  %v186 = vadd.f32 %v172, %v185
  %v187 = vpop.f32.mrf.mxu0
  %v188 = vadd.f32 %v174, %v187
  %189 = vdwg.mxu0
  %v190 = vadd.f32 %v20, %v186
  %v191 = vadd.f32 %v21, %v188
  %192 = vst [vmem:[#allocation2] sm:$0xff] %v190
  %193 = vst [vmem:[#allocation2 + $0x8] sm:$0xff] %v191
  // Predicated region
  $region18: #{selector_global_forward.6} parent=0 // pred_check
    %p194 = pneg %p14
  $region19: #{selector_global_forward.6} parent=0 // pred_check_branch
    %196 = sbr.rel (%p194) target = $region21
  $region20: #{selector_global_forward.6} parent=0 // pred_region
    %v197 = vld [vmem:[#allocation2] sm:$0xff]
    %v198 = vld [vmem:[#allocation2 + $0x8] sm:$0xff]
    %v199 = vld [vmem:[%s2] sm:$0x1]
    %v201 = vperm.slane %v199, 0
    %v203 = vadd.f32 %v197, %v201
    %v204 = vadd.f32 %v198, %v201
    %vm205 = vcmp.ge.f32.partialorder %v203, 0.0
    %vm206 = vcmp.ge.f32.partialorder %v204, 0.0
    %v207 = vmul.f32 %v203, 0.01
    %v208 = vmul.f32 %v204, 0.01
    %v209 = vsel %vm205, %v203, %v207
    %v210 = vsel %vm206, %v204, %v208
    %v211 = vpack.c.bf16 %v209, %v209
    %v212 = vpack.c.bf16 %v210, %v210
    %213 = vst [vmem:[%s3] sm:$0xf] %v211
    %214 = vst [vmem:[%s3 + $0x4] sm:$0xf] %v212
  $region21: #{selector_global_forward.6} parent=0 // pred_fallthru
    _
  // Predicated region
  $region22: #{selector_global_forward.6} parent=0 // pred_check
    _
  $region23: #{selector_global_forward.6} parent=0 // pred_check_branch
    %216 = sbr.rel (0) target = $region25
  $region24: #{selector_global_forward.6} parent=0 // pred_region
    _
  $region25: #{selector_global_forward.6} parent=0 // pred_fallthru
    _
  // Predicated region
  $region26: #{selector_global_forward.6} parent=0 // pred_check
    _
  $region27: #{selector_global_forward.6} parent=0 // pred_check_branch
    %218 = sbr.rel (0) target = $region29
  $region28: #{selector_global_forward.6} parent=0 // pred_region
    _
  $region29: #{selector_global_forward.6} parent=0 // pred_fallthru
    _

// kernel: selector_global_forward.7
$region0: #{selector_global_forward.7}
  #allocation0 [shape = 'u32[]', space=smem, size = 0x4, offset = 0x4, fixed_abs, tag = 'smem constant byte address 0x4 - core index']
  #allocation1 [shape = 'u32[72,128]{1,0:T(1,128)}', space=vmem, size = 0x9000, scoped, tag = 'internal scratch']
  #allocation2 [shape = 'f32[8,128]{1,0:T(8,128)}', space=vmem, size = 0x1000, scoped, tag = 'scratch operand']
  %s0 = inlined_call_operand.vmem [shape: bf16[8,256], index: 0, kind: input, shape index: {}]
  %s1 = inlined_call_operand.vmem [shape: bf16[256,128], index: 1, kind: input, shape index: {}]
  %s2 = inlined_call_operand.vmem [shape: f32[1,128], index: 2, kind: input, shape index: {}]
  %s3 = inlined_call_operand.vmem [shape: f32[8,128], index: 3, kind: output, shape index: {}]
  %s4 = sld [smem:[#allocation0]]
  $region30: #{selector_global_forward.7} parent=0
    _
  %s6 = ssub.s32 1, %s4
  %s7 = scalar_select 0, %s6, %s4
  // Predicated region
  $region2: #{selector_global_forward.7} parent=0 // pred_check
    _
  $region3: #{selector_global_forward.7} parent=0 // pred_check_branch
    %9 = sbr.rel (0) target = $region5
  $region4: #{selector_global_forward.7} parent=0 // pred_region
    _
  $region5: #{selector_global_forward.7} parent=0 // pred_fallthru
    _
  // Predicated region
  $region6: #{selector_global_forward.7} parent=0 // pred_check
    _
  $region7: #{selector_global_forward.7} parent=0 // pred_check_branch
    %11 = sbr.rel (0) target = $region9
  $region8: #{selector_global_forward.7} parent=0 // pred_region
    _
  $region9: #{selector_global_forward.7} parent=0 // pred_fallthru
    _
  // Predicated region
  $region10: #{selector_global_forward.7} parent=0 // pred_check
    _
  $region11: #{selector_global_forward.7} parent=0 // pred_check_branch
    %13 = sbr.rel (0) target = $region13
  $region12: #{selector_global_forward.7} parent=0 // pred_region
    _
  $region13: #{selector_global_forward.7} parent=0 // pred_fallthru
    _
  %p14 = scmp.eq.s32.totalorder 0, 0
  // Predicated region
  $region14: #{selector_global_forward.7} parent=0 // pred_check
    %p15 = pneg %p14
  $region15: #{selector_global_forward.7} parent=0 // pred_check_branch
    %17 = sbr.rel (%p15) target = $region17
  $region16: #{selector_global_forward.7} parent=0 // pred_region
    %18 = vst [vmem:[#allocation2] sm:$0xff] 0.0
  $region17: #{selector_global_forward.7} parent=0 // pred_fallthru
    _
  %v19 = vld [vmem:[#allocation2] sm:$0xff]
  %v20 = vld [vmem:[%s0] sm:$0xff]
  %v21 = vld [vmem:[%s1] sm:$0xf]
  %v22 = vld [vmem:[%s1 + $0x4] sm:$0xf]
  %v23 = vld [vmem:[%s1 + $0x8] sm:$0xf]
  %v24 = vld [vmem:[%s1 + $0xc] sm:$0xf]
  %v25 = vld [vmem:[%s1 + $0x10] sm:$0xf]
  %v26 = vld [vmem:[%s1 + $0x14] sm:$0xf]
  %v27 = vld [vmem:[%s1 + $0x18] sm:$0xf]
  %v28 = vld [vmem:[%s1 + $0x1c] sm:$0xf]
  %v29 = vld [vmem:[%s1 + $0x20] sm:$0xf]
  %v30 = vld [vmem:[%s1 + $0x24] sm:$0xf]
  %v31 = vld [vmem:[%s1 + $0x28] sm:$0xf]
  %v32 = vld [vmem:[%s1 + $0x2c] sm:$0xf]
  %v33 = vld [vmem:[%s1 + $0x30] sm:$0xf]
  %v34 = vld [vmem:[%s1 + $0x34] sm:$0xf]
  %v35 = vld [vmem:[%s1 + $0x38] sm:$0xf]
  %v36 = vld [vmem:[%s1 + $0x3c] sm:$0xf]
  %v37 = vld [vmem:[%s1 + $0x40] sm:$0xf]
  %v38 = vld [vmem:[%s1 + $0x44] sm:$0xf]
  %v39 = vld [vmem:[%s1 + $0x48] sm:$0xf]
  %v40 = vld [vmem:[%s1 + $0x4c] sm:$0xf]
  %v41 = vld [vmem:[%s1 + $0x50] sm:$0xf]
  %v42 = vld [vmem:[%s1 + $0x54] sm:$0xf]
  %v43 = vld [vmem:[%s1 + $0x58] sm:$0xf]
  %v44 = vld [vmem:[%s1 + $0x5c] sm:$0xf]
  %v45 = vld [vmem:[%s1 + $0x60] sm:$0xf]
  %v46 = vld [vmem:[%s1 + $0x64] sm:$0xf]
  %v47 = vld [vmem:[%s1 + $0x68] sm:$0xf]
  %v48 = vld [vmem:[%s1 + $0x6c] sm:$0xf]
  %v49 = vld [vmem:[%s1 + $0x70] sm:$0xf]
  %v50 = vld [vmem:[%s1 + $0x74] sm:$0xf]
  %v51 = vld [vmem:[%s1 + $0x78] sm:$0xf]
  %v52 = vld [vmem:[%s1 + $0x7c] sm:$0xf]
  %v54 = vunpack.c.l.b16 %v20
  %v55 = vunpack.c.h.b16 %v20
  %v56 = vpack.c.b16 %v54, %v54
  %v57 = vpack.c.b16 %v55, %v55
  %v92 = vunpack.c.l.b16 %v21
  %v93 = vunpack.c.l.b16 %v22
  %v94 = vunpack.c.l.b16 %v23
  %v95 = vunpack.c.l.b16 %v24
  %v96 = vunpack.c.l.b16 %v25
  %v97 = vunpack.c.l.b16 %v26
  %v98 = vunpack.c.l.b16 %v27
  %v99 = vunpack.c.l.b16 %v28
  %v100 = vunpack.c.l.b16 %v29
  %v101 = vunpack.c.l.b16 %v30
  %v102 = vunpack.c.l.b16 %v31
  %v103 = vunpack.c.l.b16 %v32
  %v104 = vunpack.c.l.b16 %v33
  %v105 = vunpack.c.l.b16 %v34
  %v106 = vunpack.c.l.b16 %v35
  %v107 = vunpack.c.l.b16 %v36
  %v108 = vunpack.c.l.b16 %v37
  %v109 = vunpack.c.l.b16 %v38
  %v110 = vunpack.c.l.b16 %v39
  %v111 = vunpack.c.l.b16 %v40
  %v112 = vunpack.c.l.b16 %v41
  %v113 = vunpack.c.l.b16 %v42
  %v114 = vunpack.c.l.b16 %v43
  %v115 = vunpack.c.l.b16 %v44
  %v116 = vunpack.c.l.b16 %v45
  %v117 = vunpack.c.l.b16 %v46
  %v118 = vunpack.c.l.b16 %v47
  %v119 = vunpack.c.l.b16 %v48
  %v120 = vunpack.c.l.b16 %v49
  %v121 = vunpack.c.l.b16 %v50
  %v122 = vunpack.c.l.b16 %v51
  %v123 = vunpack.c.l.b16 %v52
  %v124 = vpack.c.b16 %v93, %v92
  %v125 = vpack.c.b16 %v95, %v94
  %v126 = vpack.c.b16 %v97, %v96
  %v127 = vpack.c.b16 %v99, %v98
  %v128 = vpack.c.b16 %v101, %v100
  %v129 = vpack.c.b16 %v103, %v102
  %v130 = vpack.c.b16 %v105, %v104
  %v131 = vpack.c.b16 %v107, %v106
  %v132 = vpack.c.b16 %v109, %v108
  %v133 = vpack.c.b16 %v111, %v110
  %v134 = vpack.c.b16 %v113, %v112
  %v135 = vpack.c.b16 %v115, %v114
  %v136 = vpack.c.b16 %v117, %v116
  %v137 = vpack.c.b16 %v119, %v118
  %v138 = vpack.c.b16 %v121, %v120
  %v139 = vpack.c.b16 %v123, %v122
  %156 = vmatpush.bf16.msra.mxu0 %v131
  %157 = vmatpush.bf16.msra.mxu0 %v130
  %158 = vmatpush.bf16.msra.mxu0 %v129
  %159 = vmatpush.bf16.msra.mxu0 %v128
  %160 = vmatpush.bf16.msra.mxu0 %v127
  %161 = vmatpush.bf16.msra.mxu0 %v126
  %162 = vmatpush.bf16.msra.mxu0 %v125
  %163 = vmatpush.bf16.msra.mxu0 %v124
  %164 = vmatmul.bf16.gmra.mxu0 %v56
  %v165 = vpop.f32.mrf.mxu0
  %v166 = vadd.f32 0.0, %v165
  %v167 = vpop.f32.mrf.mxu0
  %168 = vdwg.mxu0
  %169 = vmatpush.bf16.msra.mxu0 %v139
  %170 = vmatpush.bf16.msra.mxu0 %v138
  %171 = vmatpush.bf16.msra.mxu0 %v137
  %172 = vmatpush.bf16.msra.mxu0 %v136
  %173 = vmatpush.bf16.msra.mxu0 %v135
  %174 = vmatpush.bf16.msra.mxu0 %v134
  %175 = vmatpush.bf16.msra.mxu0 %v133
  %176 = vmatpush.bf16.msra.mxu0 %v132
  %177 = vmatmul.bf16.gmra.mxu0 %v57
  %v178 = vpop.f32.mrf.mxu0
  %v179 = vadd.f32 %v166, %v178
  %v180 = vpop.f32.mrf.mxu0
  %181 = vdwg.mxu0
  %v182 = vadd.f32 %v19, %v179
  %183 = vst [vmem:[#allocation2] sm:$0xff] %v182
  // Predicated region
  $region18: #{selector_global_forward.7} parent=0 // pred_check
    %p184 = pneg %p14
  $region19: #{selector_global_forward.7} parent=0 // pred_check_branch
    %186 = sbr.rel (%p184) target = $region21
  $region20: #{selector_global_forward.7} parent=0 // pred_region
    %v187 = vld [vmem:[#allocation2] sm:$0xff]
    %v188 = vld [vmem:[%s2] sm:$0x1]
    %v190 = vperm.slane %v188, 0
    %v192 = vadd.f32 %v187, %v190
    %193 = vst [vmem:[%s3] sm:$0xff] %v192
  $region21: #{selector_global_forward.7} parent=0 // pred_fallthru
    _
  // Predicated region
  $region22: #{selector_global_forward.7} parent=0 // pred_check
    _
  $region23: #{selector_global_forward.7} parent=0 // pred_check_branch
    %195 = sbr.rel (0) target = $region25
  $region24: #{selector_global_forward.7} parent=0 // pred_region
    _
  $region25: #{selector_global_forward.7} parent=0 // pred_fallthru
    _
  // Predicated region
  $region26: #{selector_global_forward.7} parent=0 // pred_check
    _
  $region27: #{selector_global_forward.7} parent=0 // pred_check_branch
    %197 = sbr.rel (0) target = $region29
  $region28: #{selector_global_forward.7} parent=0 // pred_region
    _
  $region29: #{selector_global_forward.7} parent=0 // pred_fallthru
    _

// kernel: selector_global_forward.8
$region0: #{selector_global_forward.8}
  #allocation0 [shape = 'u32[]', space=smem, size = 0x4, offset = 0x4, fixed_abs, tag = 'smem constant byte address 0x4 - core index']
  #allocation1 [shape = 'u32[72,128]{1,0:T(1,128)}', space=vmem, size = 0x9000, scoped, tag = 'internal scratch']
  #allocation2 [shape = 'f32[8,128]{1,0:T(8,128)}', space=vmem, size = 0x1000, scoped, tag = 'scratch operand']
  %s0 = inlined_call_operand.vmem [shape: bf16[8,128], index: 0, kind: input, shape index: {}]
  %s1 = inlined_call_operand.vmem [shape: bf16[128,128], index: 1, kind: input, shape index: {}]
  %s2 = inlined_call_operand.vmem [shape: f32[1,128], index: 2, kind: input, shape index: {}]
  %s3 = inlined_call_operand.vmem [shape: f32[8,128], index: 3, kind: output, shape index: {}]
  %s4 = sld [smem:[#allocation0]]
  $region30: #{selector_global_forward.8} parent=0
    _
  %s6 = ssub.s32 1, %s4
  %s7 = scalar_select 0, %s6, %s4
  // Predicated region
  $region2: #{selector_global_forward.8} parent=0 // pred_check
    _
  $region3: #{selector_global_forward.8} parent=0 // pred_check_branch
    %9 = sbr.rel (0) target = $region5
  $region4: #{selector_global_forward.8} parent=0 // pred_region
    _
  $region5: #{selector_global_forward.8} parent=0 // pred_fallthru
    _
  // Predicated region
  $region6: #{selector_global_forward.8} parent=0 // pred_check
    _
  $region7: #{selector_global_forward.8} parent=0 // pred_check_branch
    %11 = sbr.rel (0) target = $region9
  $region8: #{selector_global_forward.8} parent=0 // pred_region
    _
  $region9: #{selector_global_forward.8} parent=0 // pred_fallthru
    _
  // Predicated region
  $region10: #{selector_global_forward.8} parent=0 // pred_check
    _
  $region11: #{selector_global_forward.8} parent=0 // pred_check_branch
    %13 = sbr.rel (0) target = $region13
  $region12: #{selector_global_forward.8} parent=0 // pred_region
    _
  $region13: #{selector_global_forward.8} parent=0 // pred_fallthru
    _
  %p14 = scmp.eq.s32.totalorder 0, 0
  // Predicated region
  $region14: #{selector_global_forward.8} parent=0 // pred_check
    %p15 = pneg %p14
  $region15: #{selector_global_forward.8} parent=0 // pred_check_branch
    %17 = sbr.rel (%p15) target = $region17
  $region16: #{selector_global_forward.8} parent=0 // pred_region
    %18 = vst [vmem:[#allocation2] sm:$0xff] 0.0
  $region17: #{selector_global_forward.8} parent=0 // pred_fallthru
    _
  %v19 = vld [vmem:[#allocation2] sm:$0xff]
  %v20 = vld [vmem:[%s0] sm:$0xf]
  %v21 = vld [vmem:[%s1] sm:$0xf]
  %v22 = vld [vmem:[%s1 + $0x4] sm:$0xf]
  %v23 = vld [vmem:[%s1 + $0x8] sm:$0xf]
  %v24 = vld [vmem:[%s1 + $0xc] sm:$0xf]
  %v25 = vld [vmem:[%s1 + $0x10] sm:$0xf]
  %v26 = vld [vmem:[%s1 + $0x14] sm:$0xf]
  %v27 = vld [vmem:[%s1 + $0x18] sm:$0xf]
  %v28 = vld [vmem:[%s1 + $0x1c] sm:$0xf]
  %v29 = vld [vmem:[%s1 + $0x20] sm:$0xf]
  %v30 = vld [vmem:[%s1 + $0x24] sm:$0xf]
  %v31 = vld [vmem:[%s1 + $0x28] sm:$0xf]
  %v32 = vld [vmem:[%s1 + $0x2c] sm:$0xf]
  %v33 = vld [vmem:[%s1 + $0x30] sm:$0xf]
  %v34 = vld [vmem:[%s1 + $0x34] sm:$0xf]
  %v35 = vld [vmem:[%s1 + $0x38] sm:$0xf]
  %v36 = vld [vmem:[%s1 + $0x3c] sm:$0xf]
  %v53 = vunpack.c.l.b16 %v21
  %v54 = vunpack.c.l.b16 %v22
  %v55 = vunpack.c.l.b16 %v23
  %v56 = vunpack.c.l.b16 %v24
  %v57 = vunpack.c.l.b16 %v25
  %v58 = vunpack.c.l.b16 %v26
  %v59 = vunpack.c.l.b16 %v27
  %v60 = vunpack.c.l.b16 %v28
  %v61 = vunpack.c.l.b16 %v29
  %v62 = vunpack.c.l.b16 %v30
  %v63 = vunpack.c.l.b16 %v31
  %v64 = vunpack.c.l.b16 %v32
  %v65 = vunpack.c.l.b16 %v33
  %v66 = vunpack.c.l.b16 %v34
  %v67 = vunpack.c.l.b16 %v35
  %v68 = vunpack.c.l.b16 %v36
  %v69 = vpack.c.b16 %v54, %v53
  %v70 = vpack.c.b16 %v56, %v55
  %v71 = vpack.c.b16 %v58, %v57
  %v72 = vpack.c.b16 %v60, %v59
  %v73 = vpack.c.b16 %v62, %v61
  %v74 = vpack.c.b16 %v64, %v63
  %v75 = vpack.c.b16 %v66, %v65
  %v76 = vpack.c.b16 %v68, %v67
  %85 = vmatpush.bf16.msra.mxu0 %v76
  %86 = vmatpush.bf16.msra.mxu0 %v75
  %87 = vmatpush.bf16.msra.mxu0 %v74
  %88 = vmatpush.bf16.msra.mxu0 %v73
  %89 = vmatpush.bf16.msra.mxu0 %v72
  %90 = vmatpush.bf16.msra.mxu0 %v71
  %91 = vmatpush.bf16.msra.mxu0 %v70
  %92 = vmatpush.bf16.msra.mxu0 %v69
  %93 = vmatmul.bf16.gmra.mxu0 %v20
  %v94 = vpop.f32.mrf.mxu0
  %v95 = vadd.f32 0.0, %v94
  %v96 = vpop.f32.mrf.mxu0
  %97 = vdwg.mxu0
  %v98 = vadd.f32 %v19, %v95
  %99 = vst [vmem:[#allocation2] sm:$0xff] %v98
  // Predicated region
  $region18: #{selector_global_forward.8} parent=0 // pred_check
    %p100 = pneg %p14
  $region19: #{selector_global_forward.8} parent=0 // pred_check_branch
    %102 = sbr.rel (%p100) target = $region21
  $region20: #{selector_global_forward.8} parent=0 // pred_region
    %v103 = vld [vmem:[#allocation2] sm:$0xff]
    %v104 = vld [vmem:[%s2] sm:$0x1]
    %v106 = vperm.slane %v104, 0
    %v108 = vadd.f32 %v103, %v106
    %109 = vst [vmem:[%s3] sm:$0xff] %v108
  $region21: #{selector_global_forward.8} parent=0 // pred_fallthru
    _
  // Predicated region
  $region22: #{selector_global_forward.8} parent=0 // pred_check
    _
  $region23: #{selector_global_forward.8} parent=0 // pred_check_branch
    %111 = sbr.rel (0) target = $region25
  $region24: #{selector_global_forward.8} parent=0 // pred_region
    _
  $region25: #{selector_global_forward.8} parent=0 // pred_fallthru
    _
  // Predicated region
  $region26: #{selector_global_forward.8} parent=0 // pred_check
    _
  $region27: #{selector_global_forward.8} parent=0 // pred_check_branch
    %113 = sbr.rel (0) target = $region29
  $region28: #{selector_global_forward.8} parent=0 // pred_region
    _
  $region29: #{selector_global_forward.8} parent=0 // pred_fallthru
    _

// kernel: selector_global_forward.9
$region0: #{selector_global_forward.9}
  #allocation0 [shape = 'u32[]', space=smem, size = 0x4, offset = 0x4, fixed_abs, tag = 'smem constant byte address 0x4 - core index']
  #allocation1 [shape = 'u32[72,128]{1,0:T(1,128)}', space=vmem, size = 0x9000, scoped, tag = 'internal scratch']
  #allocation2 [shape = 'bf16[8,256]{1,0:T(8,128)(2,1)}', space=vmem, size = 0x1000, scoped, tag = 'scratch operand']
  #allocation3 [shape = 'f32[1,1]{1,0:T(1,128)S(1)}', space=vmem, size = 0x200, scoped, tag = 'scoped memory for selector_global_forward.9']
  %s0 = inlined_call_operand.vmem [shape: bf16[8,256], index: 0, kind: input, shape index: {}]
  %s1 = inlined_call_operand.vmem [shape: bf16[3,256,256], index: 1, kind: input, shape index: {}]
  %s2 = inlined_call_operand.vmem [shape: f32[3,1,256], index: 2, kind: input, shape index: {}]
  %s3 = inlined_call_operand.vmem [shape: f32[1,256], index: 3, kind: input, shape index: {}]
  %s4 = inlined_call_operand.<no memory space> [shape: f32[1,1], index: 4, kind: input, shape index: {}]
  %s5 = inlined_call_operand.vmem [shape: f32[8,128], index: 5, kind: output, shape index: {}]
  %s6 = sld [smem:[#allocation0]]
  $region65: #{selector_global_forward.9} parent=0
    _
  %s8 = ssub.s32 1, %s6
  %s9 = scalar_select 0, %s8, %s6
  %v10 = vstv %s4
  %11 = vst [vmem:[#allocation3] sm:$0x1] %v10
  loop: start=0, step=1, limit=5
  $region2: #{selector_global_forward.9} parent=0 // loop_pre_header
    _
  $region3: #{selector_global_forward.9} parent=0 // loop_header
    %s13 = sphi 0, %s17
    %p14 = scmp.ge.s32.totalorder %s13, 5
    %s20 = sphi 0, %s32
    %s21 = sphi 0, %s28
    %s22 = sphi 0, %s20
    %s23 = sphi 0, %s21
    %s24 = sphi 0, %s22
    %s25 = sphi 0, %s23
    %s35 = sphi 0, %s37
    %s38 = sphi 0, %s35
    %s39 = sphi 0, %s38
    %s55 = sphi 0, %s39
    %s61 = sphi 0, %s63
    %s64 = sphi 0, %s61
    %s65 = sphi 0, %s64
    %s81 = sphi 0, %s65
    %s87 = sphi 0, %s89
    %s90 = sphi 0, %s87
    %s91 = sphi 0, %s90
    %s107 = sphi 0, %s91
    %s111 = sphi 0, %s111
    %s113 = sphi 0, %s111
    %s114 = sphi 0, %s113
    %s128 = sphi 0, %s114
    %s132 = sphi 0, %s132
    %s134 = sphi 0, %s132
    %s135 = sphi 0, %s134
    %s149 = sphi 0, %s135
    %s155 = sphi 0, %s157
    %s158 = sphi 0, %s155
    %s159 = sphi 0, %s158
    %s175 = sphi 0, %s159
  $region4: #{selector_global_forward.9} parent=0 // loop_header_branch
    %16 = sbr.rel (%p14) target = $region8
  $region5: #{selector_global_forward.9} parent=0 // loop_body
    %s18 = ssub.s32 %s13, 1
    %s19 = ssub.s32 %s13, 2
    %s26 = sadd.s32 1, %s21
    %p27 = scmp.ge.s32.totalorder %s26, 3
    %s28 = scalar_select %p27, 0, %s26
    %s29 = sadd.s32 1, %s20
    %s30 = scalar_select %p27, %s29, %s20
    %p31 = scmp.ge.s32.totalorder %s30, 1
    %s32 = scalar_select %p31, 0, %s30
    %s33 = ssub.s32 %s20, %s32
    %p34 = scmp.eq.s32.totalorder %s33, 0
    %s36 = sadd.s32 %s35, 1
    %s37 = scalar_select %p34, %s35, %s36
    %p40 = pneg %p34
    %p41 = scmp.eq.s32.totalorder %s13, 2
    %p42 = por %p40, %p41
    %p43 = scmp.ne.s32.totalorder %s35, %s38
    %p44 = scmp.eq.s32.totalorder %s13, 0
    %p45 = por %p43, %p44
    %p46 = scmp.ne.s32.totalorder %s35, %s38
    %p47 = scmp.eq.s32.totalorder %s18, 2
    %p48 = por %p46, %p47
    %p49 = scmp.ne.s32.totalorder %s38, %s39
    %p50 = scmp.eq.s32.totalorder %s18, 0
    %p51 = por %p49, %p50
    %p52 = scmp.ne.s32.totalorder %s38, %s39
    %p53 = scmp.eq.s32.totalorder %s19, 2
    %p54 = por %p52, %p53
    %p56 = scmp.ne.s32.totalorder %s39, %s55
    %p57 = scmp.eq.s32.totalorder %s19, 0
    %p58 = por %p56, %p57
    %s59 = ssub.s32 %s21, %s28
    %p60 = scmp.eq.s32.totalorder %s59, 0
    %s62 = sadd.s32 %s61, 1
    %s63 = scalar_select %p60, %s61, %s62
    %p66 = pneg %p60
    %p67 = scmp.eq.s32.totalorder %s13, 2
    %p68 = por %p66, %p67
    %p69 = scmp.ne.s32.totalorder %s61, %s64
    %p70 = scmp.eq.s32.totalorder %s13, 0
    %p71 = por %p69, %p70
    %p72 = scmp.ne.s32.totalorder %s61, %s64
    %p73 = scmp.eq.s32.totalorder %s18, 2
    %p74 = por %p72, %p73
    %p75 = scmp.ne.s32.totalorder %s64, %s65
    %p76 = scmp.eq.s32.totalorder %s18, 0
    %p77 = por %p75, %p76
    %p78 = scmp.ne.s32.totalorder %s64, %s65
    %p79 = scmp.eq.s32.totalorder %s19, 2
    %p80 = por %p78, %p79
    %p82 = scmp.ne.s32.totalorder %s65, %s81
    %p83 = scmp.eq.s32.totalorder %s19, 0
    %p84 = por %p82, %p83
    %s85 = ssub.s32 %s21, %s28
    %p86 = scmp.eq.s32.totalorder %s85, 0
    %s88 = sadd.s32 %s87, 1
    %s89 = scalar_select %p86, %s87, %s88
    %p92 = pneg %p86
    %p93 = scmp.eq.s32.totalorder %s13, 2
    %p94 = por %p92, %p93
    %p95 = scmp.ne.s32.totalorder %s87, %s90
    %p96 = scmp.eq.s32.totalorder %s13, 0
    %p97 = por %p95, %p96
    %p98 = scmp.ne.s32.totalorder %s87, %s90
    %p99 = scmp.eq.s32.totalorder %s18, 2
    %p100 = por %p98, %p99
    %p101 = scmp.ne.s32.totalorder %s90, %s91
    %p102 = scmp.eq.s32.totalorder %s18, 0
    %p103 = por %p101, %p102
    %p104 = scmp.ne.s32.totalorder %s90, %s91
    %p105 = scmp.eq.s32.totalorder %s19, 2
    %p106 = por %p104, %p105
    %p108 = scmp.ne.s32.totalorder %s91, %s107
    %p109 = scmp.eq.s32.totalorder %s19, 0
    %p110 = por %p108, %p109
    %s112 = sadd.s32 %s111, 1
    %p115 = scmp.eq.s32.totalorder %s13, 2
    %p116 = scmp.ne.s32.totalorder %s111, %s113
    %p117 = scmp.eq.s32.totalorder %s13, 0
    %p118 = por %p116, %p117
    %p119 = scmp.ne.s32.totalorder %s111, %s113
    %p120 = scmp.eq.s32.totalorder %s18, 2
    %p121 = por %p119, %p120
    %p122 = scmp.ne.s32.totalorder %s113, %s114
    %p123 = scmp.eq.s32.totalorder %s18, 0
    %p124 = por %p122, %p123
    %p125 = scmp.ne.s32.totalorder %s113, %s114
    %p126 = scmp.eq.s32.totalorder %s19, 2
    %p127 = por %p125, %p126
    %p129 = scmp.ne.s32.totalorder %s114, %s128
    %p130 = scmp.eq.s32.totalorder %s19, 0
    %p131 = por %p129, %p130
    %s133 = sadd.s32 %s132, 1
    %p136 = scmp.eq.s32.totalorder %s13, 2
    %p137 = scmp.ne.s32.totalorder %s132, %s134
    %p138 = scmp.eq.s32.totalorder %s13, 0
    %p139 = por %p137, %p138
    %p140 = scmp.ne.s32.totalorder %s132, %s134
    %p141 = scmp.eq.s32.totalorder %s18, 2
    %p142 = por %p140, %p141
    %p143 = scmp.ne.s32.totalorder %s134, %s135
    %p144 = scmp.eq.s32.totalorder %s18, 0
    %p145 = por %p143, %p144
    %p146 = scmp.ne.s32.totalorder %s134, %s135
    %p147 = scmp.eq.s32.totalorder %s19, 2
    %p148 = por %p146, %p147
    %p150 = scmp.ne.s32.totalorder %s135, %s149
    %p151 = scmp.eq.s32.totalorder %s19, 0
    %p152 = por %p150, %p151
    %s153 = ssub.s32 %s20, %s32
    %p154 = scmp.eq.s32.totalorder %s153, 0
    %s156 = sadd.s32 %s155, 1
    %s157 = scalar_select %p154, %s155, %s156
    %p160 = pneg %p154
    %p161 = scmp.eq.s32.totalorder %s13, 2
    %p162 = por %p160, %p161
    %p163 = scmp.ne.s32.totalorder %s155, %s158
    %p164 = scmp.eq.s32.totalorder %s13, 0
    %p165 = por %p163, %p164
    %p166 = scmp.ne.s32.totalorder %s155, %s158
    %p167 = scmp.eq.s32.totalorder %s18, 2
    %p168 = por %p166, %p167
    %p169 = scmp.ne.s32.totalorder %s158, %s159
    %p170 = scmp.eq.s32.totalorder %s18, 0
    %p171 = por %p169, %p170
    %p172 = scmp.ne.s32.totalorder %s158, %s159
    %p173 = scmp.eq.s32.totalorder %s19, 2
    %p174 = por %p172, %p173
    %p176 = scmp.ne.s32.totalorder %s159, %s175
    %p177 = scmp.eq.s32.totalorder %s19, 0
    %p178 = por %p176, %p177
    %p179 = scmp.le.s32.totalorder 1, %s13
    %p180 = scmp.lt.s32.totalorder %s13, 4
    %p181 = pnand %p179, %p180
    %p182 = pneg %p181
    // Predicated region
    $region9: #{selector_global_forward.9} parent=5 // pred_check
      _
    $region10: #{selector_global_forward.9} parent=5 // pred_check_branch
      %184 = sbr.rel (%p181) target = $region12
    $region11: #{selector_global_forward.9} parent=5 // pred_region
      %s185 = ssub.s32 %s13, 1
      // Predicated region
      $region13: #{selector_global_forward.9} parent=11 // pred_check
        %p186 = pneg %p51
      $region14: #{selector_global_forward.9} parent=11 // pred_check_branch
        %188 = sbr.rel (%p186) target = $region16
      $region15: #{selector_global_forward.9} parent=11 // pred_region
        %p189 = scmp.lt.s32.totalorder %s22, 0
        %s190 = scalar_select %p189, %s22, 0
        %s191 = smul.addr %s190, 2
        %s192 = smul.addr %s191, 4
        %s193 = scalar_lea.vmem %s0, %s192
      $region16: #{selector_global_forward.9} parent=11 // pred_fallthru
        _
      // Predicated region
      $region17: #{selector_global_forward.9} parent=11 // pred_check
        %p194 = pneg %p124
      $region18: #{selector_global_forward.9} parent=11 // pred_check_branch
        %196 = sbr.rel (%p194) target = $region20
      $region19: #{selector_global_forward.9} parent=11 // pred_region
        _
      $region20: #{selector_global_forward.9} parent=11 // pred_fallthru
        _
      // Predicated region
      $region21: #{selector_global_forward.9} parent=11 // pred_check
        %p197 = pneg %p145
      $region22: #{selector_global_forward.9} parent=11 // pred_check_branch
        %199 = sbr.rel (%p197) target = $region24
      $region23: #{selector_global_forward.9} parent=11 // pred_region
        _
      $region24: #{selector_global_forward.9} parent=11 // pred_fallthru
        _
    $region12: #{selector_global_forward.9} parent=5 // pred_fallthru
      _
    %p200 = scmp.lt.s32.totalorder %s13, 3
    // Predicated region
    $region25: #{selector_global_forward.9} parent=5 // pred_check
      %p201 = pneg %p200
    $region26: #{selector_global_forward.9} parent=5 // pred_check_branch
      %203 = sbr.rel (%p201) target = $region28
    $region27: #{selector_global_forward.9} parent=5 // pred_region
      // Predicated region
      $region29: #{selector_global_forward.9} parent=27 // pred_check
        %p204 = pneg %p71
      $region30: #{selector_global_forward.9} parent=27 // pred_check_branch
        %206 = sbr.rel (%p204) target = $region32
      $region31: #{selector_global_forward.9} parent=27 // pred_region
        %p207 = scmp.lt.s32.totalorder %s21, 2
        %s208 = scalar_select %p207, %s21, 2
        %s209 = smul.addr %s208, 64
        %s210 = smul.addr %s209, 4
        %s211 = scalar_lea.vmem %s1, %s210
      $region32: #{selector_global_forward.9} parent=27 // pred_fallthru
        _
      // Predicated region
      $region33: #{selector_global_forward.9} parent=27 // pred_check
        %p212 = pneg %p97
      $region34: #{selector_global_forward.9} parent=27 // pred_check_branch
        %214 = sbr.rel (%p212) target = $region36
      $region35: #{selector_global_forward.9} parent=27 // pred_region
        %p215 = scmp.lt.s32.totalorder %s21, 2
        %s216 = scalar_select %p215, %s21, 2
        %s217 = smul.addr %s216, 2
        %s218 = scalar_lea.vmem %s2, %s217
      $region36: #{selector_global_forward.9} parent=27 // pred_fallthru
        _
    $region28: #{selector_global_forward.9} parent=5 // pred_fallthru
      _
    %p219 = scmp.le.s32.totalorder 1, %s13
    %p220 = scmp.lt.s32.totalorder %s13, 4
    %p221 = pnand %p219, %p220
    %p222 = pneg %p221
    // Predicated region
    $region37: #{selector_global_forward.9} parent=5 // pred_check
      _
    $region38: #{selector_global_forward.9} parent=5 // pred_check_branch
      %224 = sbr.rel (%p221) target = $region40
    $region39: #{selector_global_forward.9} parent=5 // pred_region
      %s225 = ssub.s32 %s13, 1
      %p226 = scmp.lt.s32.totalorder %s22, 0
      %s227 = scalar_select %p226, %s22, 0
      %s228 = smul.addr %s227, 2
      %s229 = smul.addr %s228, 4
      %s230 = scalar_lea.vmem %s0, %s229
      %p231 = pneg %p51
      %p232 = pneg %p48
      %p233 = scmp.lt.s32.totalorder %s23, 2
      %s234 = scalar_select %p233, %s23, 2
      %s235 = smul.addr %s234, 64
      %s236 = smul.addr %s235, 4
      %s237 = scalar_lea.vmem %s1, %s236
      %p238 = pneg %p77
      %p239 = pneg %p74
      %p240 = scmp.lt.s32.totalorder %s23, 2
      %s241 = scalar_select %p240, %s23, 2
      %s242 = smul.addr %s241, 2
      %s243 = scalar_lea.vmem %s2, %s242
      %p244 = pneg %p103
      %p245 = pneg %p100
      %p246 = pneg %p124
      %p247 = pneg %p121
      %p248 = pneg %p145
      %p249 = pneg %p142
      %p250 = pneg %p171
      %p251 = pneg %p168
      %p252 = scmp.lt.s32.totalorder %s22, 0
      %s253 = scalar_select %p252, %s22, 0
      %s254 = smul.addr %s253, 8
      %s255 = scalar_lea.vmem %s5, %s254
      %p256 = scmp.lt.s32.totalorder %s22, 0
      %s257 = scalar_select %p256, %s22, 0
      %s258 = smul.addr %s257, 2
      %s259 = smul.addr %s258, 4
      %s260 = scalar_lea.vmem %s0, %s259
      %p261 = scmp.lt.s32.totalorder %s23, 2
      %s262 = scalar_select %p261, %s23, 2
      %s263 = smul.addr %s262, 64
      %s264 = smul.addr %s263, 4
      %s265 = scalar_lea.vmem %s1, %s264
      %p266 = scmp.lt.s32.totalorder %s23, 2
      %s267 = scalar_select %p266, %s23, 2
      %s268 = smul.addr %s267, 2
      %s269 = scalar_lea.vmem %s2, %s268
      %p270 = scmp.lt.s32.totalorder %s22, 0
      %s271 = scalar_select %p270, %s22, 0
      %s272 = smul.addr %s271, 8
      %s273 = scalar_lea.vmem %s5, %s272
      %p274 = scmp.eq.s32.totalorder %s23, 0
      // Predicated region
      $region41: #{selector_global_forward.9} parent=39 // pred_check
        %p275 = pneg %p274
      $region42: #{selector_global_forward.9} parent=39 // pred_check_branch
        %277 = sbr.rel (%p275) target = $region44
      $region43: #{selector_global_forward.9} parent=39 // pred_region
        %v278 = vld [vmem:[%s260] sm:$0xff]
        %279 = vst [vmem:[#allocation2] sm:$0xff] %v278
      $region44: #{selector_global_forward.9} parent=39 // pred_fallthru
        _
      %v280 = vld [vmem:[#allocation2] sm:$0xff]
      %v281 = vld [vmem:[%s265] sm:$0xff]
      %v282 = vld [vmem:[%s265 + $0x8] sm:$0xff]
      %v283 = vld [vmem:[%s265 + $0x10] sm:$0xff]
      %v284 = vld [vmem:[%s265 + $0x18] sm:$0xff]
      %v285 = vld [vmem:[%s265 + $0x20] sm:$0xff]
      %v286 = vld [vmem:[%s265 + $0x28] sm:$0xff]
      %v287 = vld [vmem:[%s265 + $0x30] sm:$0xff]
      %v288 = vld [vmem:[%s265 + $0x38] sm:$0xff]
      %v289 = vld [vmem:[%s265 + $0x40] sm:$0xff]
      %v290 = vld [vmem:[%s265 + $0x48] sm:$0xff]
      %v291 = vld [vmem:[%s265 + $0x50] sm:$0xff]
      %v292 = vld [vmem:[%s265 + $0x58] sm:$0xff]
      %v293 = vld [vmem:[%s265 + $0x60] sm:$0xff]
      %v294 = vld [vmem:[%s265 + $0x68] sm:$0xff]
      %v295 = vld [vmem:[%s265 + $0x70] sm:$0xff]
      %v296 = vld [vmem:[%s265 + $0x78] sm:$0xff]
      %v297 = vld [vmem:[%s265 + $0x80] sm:$0xff]
      %v298 = vld [vmem:[%s265 + $0x88] sm:$0xff]
      %v299 = vld [vmem:[%s265 + $0x90] sm:$0xff]
      %v300 = vld [vmem:[%s265 + $0x98] sm:$0xff]
      %v301 = vld [vmem:[%s265 + $0xa0] sm:$0xff]
      %v302 = vld [vmem:[%s265 + $0xa8] sm:$0xff]
      %v303 = vld [vmem:[%s265 + $0xb0] sm:$0xff]
      %v304 = vld [vmem:[%s265 + $0xb8] sm:$0xff]
      %v305 = vld [vmem:[%s265 + $0xc0] sm:$0xff]
      %v306 = vld [vmem:[%s265 + $0xc8] sm:$0xff]
      %v307 = vld [vmem:[%s265 + $0xd0] sm:$0xff]
      %v308 = vld [vmem:[%s265 + $0xd8] sm:$0xff]
      %v309 = vld [vmem:[%s265 + $0xe0] sm:$0xff]
      %v310 = vld [vmem:[%s265 + $0xe8] sm:$0xff]
      %v311 = vld [vmem:[%s265 + $0xf0] sm:$0xff]
      %v312 = vld [vmem:[%s265 + $0xf8] sm:$0xff]
      %v313 = vld [vmem:[%s269] sm:$0x3]
      %v315 = vperm.slane %v313, 0
      %v316 = vperm.slane %v313, 1
      %v320 = vunpack.c.l.b16 %v280
      %v321 = vunpack.c.h.b16 %v280
      %v322 = vpack.c.b16 %v320, %v320
      %v323 = vpack.c.b16 %v321, %v321
      %v358 = vunpack.c.l.b16 %v281
      %v359 = vunpack.c.h.b16 %v281
      %v360 = vunpack.c.l.b16 %v282
      %v361 = vunpack.c.h.b16 %v282
      %v362 = vunpack.c.l.b16 %v283
      %v363 = vunpack.c.h.b16 %v283
      %v364 = vunpack.c.l.b16 %v284
      %v365 = vunpack.c.h.b16 %v284
      %v366 = vunpack.c.l.b16 %v285
      %v367 = vunpack.c.h.b16 %v285
      %v368 = vunpack.c.l.b16 %v286
      %v369 = vunpack.c.h.b16 %v286
      %v370 = vunpack.c.l.b16 %v287
      %v371 = vunpack.c.h.b16 %v287
      %v372 = vunpack.c.l.b16 %v288
      %v373 = vunpack.c.h.b16 %v288
      %v374 = vunpack.c.l.b16 %v289
      %v375 = vunpack.c.h.b16 %v289
      %v376 = vunpack.c.l.b16 %v290
      %v377 = vunpack.c.h.b16 %v290
      %v378 = vunpack.c.l.b16 %v291
      %v379 = vunpack.c.h.b16 %v291
      %v380 = vunpack.c.l.b16 %v292
      %v381 = vunpack.c.h.b16 %v292
      %v382 = vunpack.c.l.b16 %v293
      %v383 = vunpack.c.h.b16 %v293
      %v384 = vunpack.c.l.b16 %v294
      %v385 = vunpack.c.h.b16 %v294
      %v386 = vunpack.c.l.b16 %v295
      %v387 = vunpack.c.h.b16 %v295
      %v388 = vunpack.c.l.b16 %v296
      %v389 = vunpack.c.h.b16 %v296
      %v390 = vunpack.c.l.b16 %v297
      %v391 = vunpack.c.h.b16 %v297
      %v392 = vunpack.c.l.b16 %v298
      %v393 = vunpack.c.h.b16 %v298
      %v394 = vunpack.c.l.b16 %v299
      %v395 = vunpack.c.h.b16 %v299
      %v396 = vunpack.c.l.b16 %v300
      %v397 = vunpack.c.h.b16 %v300
      %v398 = vunpack.c.l.b16 %v301
      %v399 = vunpack.c.h.b16 %v301
      %v400 = vunpack.c.l.b16 %v302
      %v401 = vunpack.c.h.b16 %v302
      %v402 = vunpack.c.l.b16 %v303
      %v403 = vunpack.c.h.b16 %v303
      %v404 = vunpack.c.l.b16 %v304
      %v405 = vunpack.c.h.b16 %v304
      %v406 = vunpack.c.l.b16 %v305
      %v407 = vunpack.c.h.b16 %v305
      %v408 = vunpack.c.l.b16 %v306
      %v409 = vunpack.c.h.b16 %v306
      %v410 = vunpack.c.l.b16 %v307
      %v411 = vunpack.c.h.b16 %v307
      %v412 = vunpack.c.l.b16 %v308
      %v413 = vunpack.c.h.b16 %v308
      %v414 = vunpack.c.l.b16 %v309
      %v415 = vunpack.c.h.b16 %v309
      %v416 = vunpack.c.l.b16 %v310
      %v417 = vunpack.c.h.b16 %v310
      %v418 = vunpack.c.l.b16 %v311
      %v419 = vunpack.c.h.b16 %v311
      %v420 = vunpack.c.l.b16 %v312
      %v421 = vunpack.c.h.b16 %v312
      %v422 = vpack.c.b16 %v360, %v358
      %v423 = vpack.c.b16 %v361, %v359
      %v424 = vpack.c.b16 %v364, %v362
      %v425 = vpack.c.b16 %v365, %v363
      %v426 = vpack.c.b16 %v368, %v366
      %v427 = vpack.c.b16 %v369, %v367
      %v428 = vpack.c.b16 %v372, %v370
      %v429 = vpack.c.b16 %v373, %v371
      %v430 = vpack.c.b16 %v376, %v374
      %v431 = vpack.c.b16 %v377, %v375
      %v432 = vpack.c.b16 %v380, %v378
      %v433 = vpack.c.b16 %v381, %v379
      %v434 = vpack.c.b16 %v384, %v382
      %v435 = vpack.c.b16 %v385, %v383
      %v436 = vpack.c.b16 %v388, %v386
      %v437 = vpack.c.b16 %v389, %v387
      %v438 = vpack.c.b16 %v392, %v390
      %v439 = vpack.c.b16 %v393, %v391
      %v440 = vpack.c.b16 %v396, %v394
      %v441 = vpack.c.b16 %v397, %v395
      %v442 = vpack.c.b16 %v400, %v398
      %v443 = vpack.c.b16 %v401, %v399
      %v444 = vpack.c.b16 %v404, %v402
      %v445 = vpack.c.b16 %v405, %v403
      %v446 = vpack.c.b16 %v408, %v406
      %v447 = vpack.c.b16 %v409, %v407
      %v448 = vpack.c.b16 %v412, %v410
      %v449 = vpack.c.b16 %v413, %v411
      %v450 = vpack.c.b16 %v416, %v414
      %v451 = vpack.c.b16 %v417, %v415
      %v452 = vpack.c.b16 %v420, %v418
      %v453 = vpack.c.b16 %v421, %v419
      %486 = vmatpush.bf16.msra.mxu0 %v436
      %487 = vmatpush.bf16.msra.mxu0 %v434
      %488 = vmatpush.bf16.msra.mxu0 %v432
      %489 = vmatpush.bf16.msra.mxu0 %v430
      %490 = vmatpush.bf16.msra.mxu0 %v428
      %491 = vmatpush.bf16.msra.mxu0 %v426
      %492 = vmatpush.bf16.msra.mxu0 %v424
      %493 = vmatpush.bf16.msra.mxu0 %v422
      %494 = vmatmul.bf16.gmra.mxu0 %v322
      %v495 = vpop.f32.mrf.mxu0
      %v496 = vadd.f32 %v315, %v495
      %v497 = vpop.f32.mrf.mxu0
      %498 = vdwg.mxu0
      %499 = vmatpush.bf16.msra.mxu0 %v452
      %500 = vmatpush.bf16.msra.mxu0 %v450
      %501 = vmatpush.bf16.msra.mxu0 %v448
      %502 = vmatpush.bf16.msra.mxu0 %v446
      %503 = vmatpush.bf16.msra.mxu0 %v444
      %504 = vmatpush.bf16.msra.mxu0 %v442
      %505 = vmatpush.bf16.msra.mxu0 %v440
      %506 = vmatpush.bf16.msra.mxu0 %v438
      %507 = vmatmul.bf16.gmra.mxu0 %v323
      %v508 = vpop.f32.mrf.mxu0
      %v509 = vadd.f32 %v496, %v508
      %v510 = vpop.f32.mrf.mxu0
      %511 = vdwg.mxu0
      %512 = vmatpush.bf16.msra.mxu0 %v437
      %513 = vmatpush.bf16.msra.mxu0 %v435
      %514 = vmatpush.bf16.msra.mxu0 %v433
      %515 = vmatpush.bf16.msra.mxu0 %v431
      %516 = vmatpush.bf16.msra.mxu0 %v429
      %517 = vmatpush.bf16.msra.mxu0 %v427
      %518 = vmatpush.bf16.msra.mxu0 %v425
      %519 = vmatpush.bf16.msra.mxu0 %v423
      %520 = vmatmul.bf16.gmra.mxu0 %v322
      %v521 = vpop.f32.mrf.mxu0
      %v522 = vadd.f32 %v316, %v521
      %v523 = vpop.f32.mrf.mxu0
      %524 = vdwg.mxu0
      %525 = vmatpush.bf16.msra.mxu0 %v453
      %526 = vmatpush.bf16.msra.mxu0 %v451
      %527 = vmatpush.bf16.msra.mxu0 %v449
      %528 = vmatpush.bf16.msra.mxu0 %v447
      %529 = vmatpush.bf16.msra.mxu0 %v445
      %530 = vmatpush.bf16.msra.mxu0 %v443
      %531 = vmatpush.bf16.msra.mxu0 %v441
      %532 = vmatpush.bf16.msra.mxu0 %v439
      %533 = vmatmul.bf16.gmra.mxu0 %v323
      %v534 = vpop.f32.mrf.mxu0
      %v535 = vadd.f32 %v522, %v534
      %v536 = vpop.f32.mrf.mxu0
      %537 = vdwg.mxu0
      %vm538 = vcmp.ge.f32.partialorder %v509, 0.0
      %vm539 = vcmp.ge.f32.partialorder %v535, 0.0
      %v540 = vmul.f32 %v509, 0.01
      %v541 = vmul.f32 %v535, 0.01
      %v542 = vsel %vm538, %v509, %v540
      %v543 = vsel %vm539, %v535, %v541
      %p544 = scmp.lt.s32.totalorder %s23, 2
      // Predicated region
      $region45: #{selector_global_forward.9} parent=39 // pred_check
        %p545 = pneg %p544
      $region46: #{selector_global_forward.9} parent=39 // pred_check_branch
        %547 = sbr.rel (%p545) target = $region48
      $region47: #{selector_global_forward.9} parent=39 // pred_region
        %v548 = vpack.c.bf16 %v543, %v542
        %549 = vst [vmem:[#allocation2] sm:$0xff] %v548
      $region48: #{selector_global_forward.9} parent=39 // pred_fallthru
        _
      %p550 = scmp.eq.s32.totalorder %s23, 2
      // Predicated region
      $region49: #{selector_global_forward.9} parent=39 // pred_check
        %p551 = pneg %p550
      $region50: #{selector_global_forward.9} parent=39 // pred_check_branch
        %553 = sbr.rel (%p551) target = $region52
      $region51: #{selector_global_forward.9} parent=39 // pred_region
        %v554 = vld [vmem:[%s3] sm:$0x3]
        %v556 = vperm.slane %v554, 0
        %v557 = vperm.slane %v554, 1
        %v560 = vmul.f32 %v542, %v556
        %v561 = vmul.f32 %v543, %v557
        %v562 = vadd.f32 %v560, %v561
        %563 = vadd.xlane.f32.xlu0 %v562
        %v564 = vpop.xlane.xlu0 %563
        %v565 = vld [vmem:[#allocation3] sm:$0x1]
        %v567 = vperm.slane %v565, 0
        %v569 = vadd.f32 %v564, %v567
        %v570 = vand.u32 2147483647, %v569
        %v571 = vsub.f32 0.0, %v570
        %v572 = vmul.f32 %v571, 1.442695
        %v573 = vpow.pop %v572
        %vm574 = vcmp.ge.f32.partialorder %v569, 0.0
        %v575 = vadd.f32 %v573, 1.0
        %v576 = vrcp.pop %v575
        %v577 = vmul.f32 %v575, %v576
        %v578 = vsub.f32 1.0, %v577
        %v579 = vmul.f32 %v576, %v578
        %v580 = vadd.f32 %v576, %v579
        %vm581 = vweird.f32 %v575
        %vm582 = vweird.f32 %v576
        %vm583 = vmor %vm581, %vm582
        %v584 = vsel %vm583, %v576, %v580
        %v585 = vand.u32 2147483647, %v575
        %vm586 = vcmp.eq.f32.partialorder %v585, 8.507059e+37
        %v587 = vand.u32 %v575, 2147483648
        %v588 = vor.u32 1.1754944e-38, %v587
        %v589 = vsel %vm586, %v588, %v584
        %v590 = vmul.f32 1.0, %v589
        %v591 = vmul.f32 %v573, %v589
        %v592 = vsel %vm574, %v590, %v591
        %594 = vset.pattern.permute.xlu0 0
        %595 = vperm.xlu0 %594, %v592
        %v596 = vpop.permute.xlu0 %595
        %598 = vst [vmem:[%s273] sm:$0xff] %v596
      $region52: #{selector_global_forward.9} parent=39 // pred_fallthru
        _
      %p599 = scmp.lt.s32.totalorder %s22, 0
      %s600 = scalar_select %p599, %s22, 0
      %s601 = smul.addr %s600, 8
      %s602 = scalar_lea.vmem %s5, %s601
      // Predicated region
      $region53: #{selector_global_forward.9} parent=39 // pred_check
        %p603 = pneg %p168
      $region54: #{selector_global_forward.9} parent=39 // pred_check_branch
        %605 = sbr.rel (%p603) target = $region56
      $region55: #{selector_global_forward.9} parent=39 // pred_region
        _
      $region56: #{selector_global_forward.9} parent=39 // pred_fallthru
        _
      // Predicated region
      $region57: #{selector_global_forward.9} parent=39 // pred_check
        %p606 = pneg %p168
      $region58: #{selector_global_forward.9} parent=39 // pred_check_branch
        %608 = sbr.rel (%p606) target = $region60
      $region59: #{selector_global_forward.9} parent=39 // pred_region
        %p609 = scmp.lt.s32.totalorder %s22, 0
        %s610 = scalar_select %p609, %s22, 0
        %s611 = smul.addr %s610, 8
        %s612 = scalar_lea.vmem %s5, %s611
      $region60: #{selector_global_forward.9} parent=39 // pred_fallthru
        _
    $region40: #{selector_global_forward.9} parent=5 // pred_fallthru
      _
    %p613 = scmp.le.s32.totalorder 2, %s13
    // Predicated region
    $region61: #{selector_global_forward.9} parent=5 // pred_check
      %p614 = pneg %p613
    $region62: #{selector_global_forward.9} parent=5 // pred_check_branch
      %616 = sbr.rel (%p614) target = $region64
    $region63: #{selector_global_forward.9} parent=5 // pred_region
      %s617 = ssub.s32 %s13, 2
    $region64: #{selector_global_forward.9} parent=5 // pred_fallthru
      _
  $region6: #{selector_global_forward.9} parent=0 // loop_footer
    %s17 = sadd.s32 1, %s13
  $region7: #{selector_global_forward.9} parent=0 // loop_footer_branch
    %12 = sbr.rel target = $region3
  $region8: #{selector_global_forward.9} parent=0 // loop_exit
    _

</llo_original>
